<compile_context>
chip_gen: v7x
topology: tpu7x:2x2x1
jax: 0.10.0
libtpu: 0.0.40
codegen_flags: <defaults>
</compile_context>

<pallas_src>
import math

import jax
import jax.numpy as jnp
from jax import lax
from jax.experimental import pallas as pl
from jax.experimental.pallas import tpu as pltpu

# Problem sizes (small, consistent with the module: d_out % num_heads == 0)
B = 2          # batch
T = 8          # num_tokens (<= context_length)
D_IN = 32      # input dim
D_OUT = 32     # output dim
NUM_HEADS = 4
HEAD_DIM = D_OUT // NUM_HEADS
DROPOUT = 0.0  # nn.Dropout(0.0) -> identity


def fuse_params(wq, wk, wv, wo, bo, num_heads):
    """One-time parameter transform (init time, NOT in the forward hot path).

    Returns:
      wqkv: (d_in, 3*d_out) head-major packed [q_h|k_h|v_h] columns per head,
            with 1/sqrt(head_dim) folded into the q columns.
      wob:  (d_out+1, d_out) = Wo rows stacked with the bias as the last row.
    """
    d_in, d_out = wq.shape
    head_dim = d_out // num_heads
    scale = 1.0 / math.sqrt(head_dim)
    blocks = []
    for h in range(num_heads):
        c = h * head_dim
        blocks += [wq[:, c:c + head_dim] * scale,
                   wk[:, c:c + head_dim],
                   wv[:, c:c + head_dim]]
    wqkv = jnp.concatenate(blocks, axis=1)                       # (d_in, 3*d_out)
    wob = jnp.concatenate([wo, bo.reshape(1, d_out)], axis=0)    # (d_out+1, d_out)
    return wqkv, wob


def _make_mha_kernel(b, t, num_heads, head_dim, d_out):
    def kernel(x_ref, wqkv_ref, wob_ref, o_ref):
        # x_ref: (b*t, d_in) -- whole (flattened) batch resident in VMEM.
        x = x_ref[...]

        # Fused QKV projection: one matmul instead of three (qkv_bias=False).
        # Scale 1/sqrt(head_dim) is already folded into the Q columns of Wqkv.
        qkv = jnp.dot(x, wqkv_ref[...],
                      preferred_element_type=jnp.float32)        # (b*t, 3*d_out)

        wob = wob_ref[...]
        wo = wob[:d_out, :]                                      # (d_out, d_out)
        bias = wob[d_out:, :]                                    # (1, d_out)

        # Causal mask (key index > query index -> masked).
        row = lax.broadcasted_iota(jnp.int32, (t, t), 0)
        col = lax.broadcasted_iota(jnp.int32, (t, t), 1)
        causal_mask = col > row

        # Static unroll over (batch, head): tiny (t x t) attention blocks.
        for bi in range(b):
            r0 = bi * t
            qkv_b = qkv[r0:r0 + t, :]          # sublane-aligned row block, once
            out_b = jnp.zeros((t, d_out), jnp.float32)
            for h in range(num_heads):
                c3 = h * 3 * head_dim
                blk = qkv_b[:, c3:c3 + 3 * head_dim]   # one contiguous lane slice
                qh = blk[:, :head_dim]
                kh = blk[:, head_dim:2 * head_dim]
                vh = blk[:, 2 * head_dim:]

                # q @ k^T without an explicit transpose: contract last dims.
                scores = lax.dot_general(
                    qh, kh, (((1,), (1,)), ((), ())),
                    preferred_element_type=jnp.float32)          # (t, t)
                scores = jnp.where(causal_mask, -1e30, scores)

                # Numerically-stable softmax (exact reciprocal; latency-bound
                # anyway, and it keeps the test tolerance tight).
                m = jnp.max(scores, axis=-1, keepdims=True)
                e = jnp.exp(scores - m)
                attn = e / jnp.sum(e, axis=-1, keepdims=True)
                # TODO(synk): dropout on attn_weights omitted (p=0.0 -> identity).

                ctx = jnp.dot(attn, vh,
                              preferred_element_type=jnp.float32)  # (t, head_dim)

                # Project this head through its (sublane-aligned) Wo row slice
                # and accumulate in registers -> no ctx scratch, no masked
                # lane-offset partial stores.
                c = h * head_dim
                out_b = out_b + jnp.dot(ctx, wo[c:c + head_dim, :],
                                        preferred_element_type=jnp.float32)

            o_ref[r0:r0 + t, :] = (out_b + bias).astype(o_ref.dtype)

    return kernel


def multi_head_attention(x, wqkv, wob, num_heads):
    """x: (B, T, D_IN); wqkv: (D_IN, 3*D_OUT) head-major; wob: (D_OUT+1, D_OUT)."""
    b, t, d_in = x.shape
    d_out = wob.shape[1]
    head_dim = d_out // num_heads
    assert wqkv.shape == (d_in, 3 * d_out)
    assert wob.shape == (d_out + 1, d_out)
    assert d_out % num_heads == 0

    x2 = x.reshape(b * t, d_in)                        # wrapper-side layout plumbing
    kernel = _make_mha_kernel(b, t, num_heads, head_dim, d_out)

    out2 = pl.pallas_call(
        kernel,
        out_shape=jax.ShapeDtypeStruct((b * t, d_out), jnp.float32),
        in_specs=[
            pl.BlockSpec(memory_space=pltpu.MemorySpace.VMEM),  # x     (B*T, D_IN)
            pl.BlockSpec(memory_space=pltpu.MemorySpace.VMEM),  # Wqkv  (D_IN, 3*D_OUT)
            pl.BlockSpec(memory_space=pltpu.MemorySpace.VMEM),  # Wo|bo (D_OUT+1, D_OUT)
        ],
        out_specs=pl.BlockSpec(memory_space=pltpu.MemorySpace.VMEM),
    )(x2, wqkv, wob)
    return out2.reshape(b, t, d_out)


def mha_reference(x, wq, wk, wv, wo, bo):
    b, t, _ = x.shape
    q = x @ wq
    k = x @ wk
    v = x @ wv
    q = q.reshape(b, t, NUM_HEADS, HEAD_DIM).transpose(0, 2, 1, 3)
    k = k.reshape(b, t, NUM_HEADS, HEAD_DIM).transpose(0, 2, 1, 3)
    v = v.reshape(b, t, NUM_HEADS, HEAD_DIM).transpose(0, 2, 1, 3)
    scores = jnp.einsum("bhqd,bhkd->bhqk", q, k) / math.sqrt(HEAD_DIM)
    mask = jnp.triu(jnp.ones((t, t), dtype=bool), k=1)
    scores = jnp.where(mask, -jnp.inf, scores)
    attn = jax.nn.softmax(scores, axis=-1)
    ctx = jnp.einsum("bhqk,bhkd->bhqd", attn, v)
    ctx = ctx.transpose(0, 2, 1, 3).reshape(b, t, D_OUT)
    return ctx @ wo + bo


if __name__ == "__main__":
    key = jax.random.PRNGKey(0)
    kx, kq, kk, kv, ko, kb = jax.random.split(key, 6)

    x = jax.random.normal(kx, (B, T, D_IN), dtype=jnp.float32)
    # Deterministic parameter init (Linear weights stored as (d_in, d_out)).
    wq = jax.random.normal(kq, (D_IN, D_OUT), dtype=jnp.float32) * 0.1
    wk = jax.random.normal(kk, (D_IN, D_OUT), dtype=jnp.float32) * 0.1
    wv = jax.random.normal(kv, (D_IN, D_OUT), dtype=jnp.float32) * 0.1
    wo = jax.random.normal(ko, (D_OUT, D_OUT), dtype=jnp.float32) * 0.1
    bo = jax.random.normal(kb, (D_OUT,), dtype=jnp.float32) * 0.1

    # One-time parameter fusion (init time; not in the per-call hot path).
    wqkv, wob = fuse_params(wq, wk, wv, wo, bo, NUM_HEADS)

    out = multi_head_attention(x, wqkv, wob, NUM_HEADS)
    out = jax.block_until_ready(out)

    ref = mha_reference(x, wq, wk, wv, wo, bo)
    assert out.shape == (B, T, D_OUT)
    assert jnp.allclose(out, ref, atol=1e-4, rtol=1e-4)
    print("KERNEL_OK")
</pallas_src>

<mosaic_0001>
module attributes {stable_mosaic.version = 11 : i64} {
  func.func @kernel(%arg0: memref<16x32xf32, #tpu.memory_space<vmem>>, %arg1: memref<32x96xf32, #tpu.memory_space<vmem>>, %arg2: memref<33x32xf32, #tpu.memory_space<vmem>>, %arg3: memref<16x32xf32, #tpu.memory_space<vmem>>) attributes {dimension_semantics = [], scalar_prefetch = 0 : i64, scratch_operands = 0 : i64, tpu.core_type = #tpu.core_type<tc>} {
    %c0 = arith.constant 0 : index
    %c0_0 = arith.constant 0 : index
    %0 = vector.load %arg0[%c0, %c0_0] : memref<16x32xf32, #tpu.memory_space<vmem>>, vector<16x32xf32>
    %c0_1 = arith.constant 0 : index
    %c0_2 = arith.constant 0 : index
    %1 = vector.load %arg1[%c0_1, %c0_2] : memref<32x96xf32, #tpu.memory_space<vmem>>, vector<32x96xf32>
    %cst = arith.constant dense<0.000000e+00> : vector<16x96xf32>
    %2 = tpu.matmul %0, %1, %cst {dimension_numbers = #tpu.dot_dimension_numbers<[1], [0], [0], [1], [0, 0, 1, 1], [], []>} : vector<16x32xf32>, vector<32x96xf32>, vector<16x96xf32> -> vector<16x96xf32>
    %c0_3 = arith.constant 0 : index
    %c0_4 = arith.constant 0 : index
    %3 = vector.load %arg2[%c0_3, %c0_4] : memref<33x32xf32, #tpu.memory_space<vmem>>, vector<33x32xf32>
    %4 = vector.extract_strided_slice %3 {offsets = [0, 0], sizes = [32, 32], strides = [1, 1]} : vector<33x32xf32> to vector<32x32xf32>
    %5 = vector.extract_strided_slice %3 {offsets = [32, 0], sizes = [1, 32], strides = [1, 1]} : vector<33x32xf32> to vector<1x32xf32>
    %6 = tpu.iota {dimensions = array<i32: 0>} : vector<8x8xi32>
    %7 = tpu.iota {dimensions = array<i32: 1>} : vector<8x8xi32>
    %8 = arith.cmpi sgt, %7, %6 : vector<8x8xi32>
    %9 = vector.extract_strided_slice %2 {offsets = [0, 0], sizes = [8, 96], strides = [1, 1]} : vector<16x96xf32> to vector<8x96xf32>
    %cst_5 = arith.constant 0.000000e+00 : f32
    %10 = vector.broadcast %cst_5 : f32 to vector<8x32xf32>
    %11 = vector.extract_strided_slice %9 {offsets = [0, 0], sizes = [8, 24], strides = [1, 1]} : vector<8x96xf32> to vector<8x24xf32>
    %12 = vector.extract_strided_slice %11 {offsets = [0, 0], sizes = [8, 8], strides = [1, 1]} : vector<8x24xf32> to vector<8x8xf32>
    %13 = vector.extract_strided_slice %11 {offsets = [0, 8], sizes = [8, 8], strides = [1, 1]} : vector<8x24xf32> to vector<8x8xf32>
    %14 = vector.extract_strided_slice %11 {offsets = [0, 16], sizes = [8, 8], strides = [1, 1]} : vector<8x24xf32> to vector<8x8xf32>
    %cst_6 = arith.constant dense<0.000000e+00> : vector<8x8xf32>
    %15 = tpu.matmul %12, %13, %cst_6 {dimension_numbers = #tpu.dot_dimension_numbers<[1], [1], [0], [0], [0, 0, 1, 0], [], []>} : vector<8x8xf32>, vector<8x8xf32>, vector<8x8xf32> -> vector<8x8xf32>
    %cst_7 = arith.constant -1.000000e+30 : f32
    %16 = vector.broadcast %cst_7 : f32 to vector<8x8xf32>
    %17 = arith.select %8, %16, %15 : vector<8x8xi1>, vector<8x8xf32>
    %cst_8 = arith.constant dense<0xFF800000> : vector<8xf32>
    %18 = vector.multi_reduction <maximumf>, %17, %cst_8 [1] : vector<8x8xf32> to vector<8xf32>
    %19 = vector.shape_cast %18 : vector<8xf32> to vector<8x1xf32>
    %20 = vector.broadcast %19 : vector<8x1xf32> to vector<8x8xf32>
    %21 = arith.subf %17, %20 : vector<8x8xf32>
    %22 = math.exp %21 : vector<8x8xf32>
    %cst_9 = arith.constant dense<0.000000e+00> : vector<8xf32>
    %23 = vector.multi_reduction <add>, %22, %cst_9 [1] : vector<8x8xf32> to vector<8xf32>
    %24 = vector.shape_cast %23 : vector<8xf32> to vector<8x1xf32>
    %25 = vector.broadcast %24 : vector<8x1xf32> to vector<8x8xf32>
    %26 = arith.divf %22, %25 : vector<8x8xf32>
    %cst_10 = arith.constant dense<0.000000e+00> : vector<8x8xf32>
    %27 = tpu.matmul %26, %14, %cst_10 {dimension_numbers = #tpu.dot_dimension_numbers<[1], [0], [0], [1], [0, 0, 1, 1], [], []>} : vector<8x8xf32>, vector<8x8xf32>, vector<8x8xf32> -> vector<8x8xf32>
    %28 = vector.extract_strided_slice %4 {offsets = [0, 0], sizes = [8, 32], strides = [1, 1]} : vector<32x32xf32> to vector<8x32xf32>
    %cst_11 = arith.constant dense<0.000000e+00> : vector<8x32xf32>
    %29 = tpu.matmul %27, %28, %cst_11 {dimension_numbers = #tpu.dot_dimension_numbers<[1], [0], [0], [1], [0, 0, 1, 1], [], []>} : vector<8x8xf32>, vector<8x32xf32>, vector<8x32xf32> -> vector<8x32xf32>
    %30 = arith.addf %10, %29 : vector<8x32xf32>
    %31 = vector.extract_strided_slice %9 {offsets = [0, 24], sizes = [8, 24], strides = [1, 1]} : vector<8x96xf32> to vector<8x24xf32>
    %32 = vector.extract_strided_slice %31 {offsets = [0, 0], sizes = [8, 8], strides = [1, 1]} : vector<8x24xf32> to vector<8x8xf32>
    %33 = vector.extract_strided_slice %31 {offsets = [0, 8], sizes = [8, 8], strides = [1, 1]} : vector<8x24xf32> to vector<8x8xf32>
    %34 = vector.extract_strided_slice %31 {offsets = [0, 16], sizes = [8, 8], strides = [1, 1]} : vector<8x24xf32> to vector<8x8xf32>
    %cst_12 = arith.constant dense<0.000000e+00> : vector<8x8xf32>
    %35 = tpu.matmul %32, %33, %cst_12 {dimension_numbers = #tpu.dot_dimension_numbers<[1], [1], [0], [0], [0, 0, 1, 0], [], []>} : vector<8x8xf32>, vector<8x8xf32>, vector<8x8xf32> -> vector<8x8xf32>
    %cst_13 = arith.constant -1.000000e+30 : f32
    %36 = vector.broadcast %cst_13 : f32 to vector<8x8xf32>
    %37 = arith.select %8, %36, %35 : vector<8x8xi1>, vector<8x8xf32>
    %cst_14 = arith.constant dense<0xFF800000> : vector<8xf32>
    %38 = vector.multi_reduction <maximumf>, %37, %cst_14 [1] : vector<8x8xf32> to vector<8xf32>
    %39 = vector.shape_cast %38 : vector<8xf32> to vector<8x1xf32>
    %40 = vector.broadcast %39 : vector<8x1xf32> to vector<8x8xf32>
    %41 = arith.subf %37, %40 : vector<8x8xf32>
    %42 = math.exp %41 : vector<8x8xf32>
    %cst_15 = arith.constant dense<0.000000e+00> : vector<8xf32>
    %43 = vector.multi_reduction <add>, %42, %cst_15 [1] : vector<8x8xf32> to vector<8xf32>
    %44 = vector.shape_cast %43 : vector<8xf32> to vector<8x1xf32>
    %45 = vector.broadcast %44 : vector<8x1xf32> to vector<8x8xf32>
    %46 = arith.divf %42, %45 : vector<8x8xf32>
    %cst_16 = arith.constant dense<0.000000e+00> : vector<8x8xf32>
    %47 = tpu.matmul %46, %34, %cst_16 {dimension_numbers = #tpu.dot_dimension_numbers<[1], [0], [0], [1], [0, 0, 1, 1], [], []>} : vector<8x8xf32>, vector<8x8xf32>, vector<8x8xf32> -> vector<8x8xf32>
    %48 = vector.extract_strided_slice %4 {offsets = [8, 0], sizes = [8, 32], strides = [1, 1]} : vector<32x32xf32> to vector<8x32xf32>
    %cst_17 = arith.constant dense<0.000000e+00> : vector<8x32xf32>
    %49 = tpu.matmul %47, %48, %cst_17 {dimension_numbers = #tpu.dot_dimension_numbers<[1], [0], [0], [1], [0, 0, 1, 1], [], []>} : vector<8x8xf32>, vector<8x32xf32>, vector<8x32xf32> -> vector<8x32xf32>
    %50 = arith.addf %30, %49 : vector<8x32xf32>
    %51 = vector.extract_strided_slice %9 {offsets = [0, 48], sizes = [8, 24], strides = [1, 1]} : vector<8x96xf32> to vector<8x24xf32>
    %52 = vector.extract_strided_slice %51 {offsets = [0, 0], sizes = [8, 8], strides = [1, 1]} : vector<8x24xf32> to vector<8x8xf32>
    %53 = vector.extract_strided_slice %51 {offsets = [0, 8], sizes = [8, 8], strides = [1, 1]} : vector<8x24xf32> to vector<8x8xf32>
    %54 = vector.extract_strided_slice %51 {offsets = [0, 16], sizes = [8, 8], strides = [1, 1]} : vector<8x24xf32> to vector<8x8xf32>
    %cst_18 = arith.constant dense<0.000000e+00> : vector<8x8xf32>
    %55 = tpu.matmul %52, %53, %cst_18 {dimension_numbers = #tpu.dot_dimension_numbers<[1], [1], [0], [0], [0, 0, 1, 0], [], []>} : vector<8x8xf32>, vector<8x8xf32>, vector<8x8xf32> -> vector<8x8xf32>
    %cst_19 = arith.constant -1.000000e+30 : f32
    %56 = vector.broadcast %cst_19 : f32 to vector<8x8xf32>
    %57 = arith.select %8, %56, %55 : vector<8x8xi1>, vector<8x8xf32>
    %cst_20 = arith.constant dense<0xFF800000> : vector<8xf32>
    %58 = vector.multi_reduction <maximumf>, %57, %cst_20 [1] : vector<8x8xf32> to vector<8xf32>
    %59 = vector.shape_cast %58 : vector<8xf32> to vector<8x1xf32>
    %60 = vector.broadcast %59 : vector<8x1xf32> to vector<8x8xf32>
    %61 = arith.subf %57, %60 : vector<8x8xf32>
    %62 = math.exp %61 : vector<8x8xf32>
    %cst_21 = arith.constant dense<0.000000e+00> : vector<8xf32>
    %63 = vector.multi_reduction <add>, %62, %cst_21 [1] : vector<8x8xf32> to vector<8xf32>
    %64 = vector.shape_cast %63 : vector<8xf32> to vector<8x1xf32>
    %65 = vector.broadcast %64 : vector<8x1xf32> to vector<8x8xf32>
    %66 = arith.divf %62, %65 : vector<8x8xf32>
    %cst_22 = arith.constant dense<0.000000e+00> : vector<8x8xf32>
    %67 = tpu.matmul %66, %54, %cst_22 {dimension_numbers = #tpu.dot_dimension_numbers<[1], [0], [0], [1], [0, 0, 1, 1], [], []>} : vector<8x8xf32>, vector<8x8xf32>, vector<8x8xf32> -> vector<8x8xf32>
    %68 = vector.extract_strided_slice %4 {offsets = [16, 0], sizes = [8, 32], strides = [1, 1]} : vector<32x32xf32> to vector<8x32xf32>
    %cst_23 = arith.constant dense<0.000000e+00> : vector<8x32xf32>
    %69 = tpu.matmul %67, %68, %cst_23 {dimension_numbers = #tpu.dot_dimension_numbers<[1], [0], [0], [1], [0, 0, 1, 1], [], []>} : vector<8x8xf32>, vector<8x32xf32>, vector<8x32xf32> -> vector<8x32xf32>
    %70 = arith.addf %50, %69 : vector<8x32xf32>
    %71 = vector.extract_strided_slice %9 {offsets = [0, 72], sizes = [8, 24], strides = [1, 1]} : vector<8x96xf32> to vector<8x24xf32>
    %72 = vector.extract_strided_slice %71 {offsets = [0, 0], sizes = [8, 8], strides = [1, 1]} : vector<8x24xf32> to vector<8x8xf32>
    %73 = vector.extract_strided_slice %71 {offsets = [0, 8], sizes = [8, 8], strides = [1, 1]} : vector<8x24xf32> to vector<8x8xf32>
    %74 = vector.extract_strided_slice %71 {offsets = [0, 16], sizes = [8, 8], strides = [1, 1]} : vector<8x24xf32> to vector<8x8xf32>
    %cst_24 = arith.constant dense<0.000000e+00> : vector<8x8xf32>
    %75 = tpu.matmul %72, %73, %cst_24 {dimension_numbers = #tpu.dot_dimension_numbers<[1], [1], [0], [0], [0, 0, 1, 0], [], []>} : vector<8x8xf32>, vector<8x8xf32>, vector<8x8xf32> -> vector<8x8xf32>
    %cst_25 = arith.constant -1.000000e+30 : f32
    %76 = vector.broadcast %cst_25 : f32 to vector<8x8xf32>
    %77 = arith.select %8, %76, %75 : vector<8x8xi1>, vector<8x8xf32>
    %cst_26 = arith.constant dense<0xFF800000> : vector<8xf32>
    %78 = vector.multi_reduction <maximumf>, %77, %cst_26 [1] : vector<8x8xf32> to vector<8xf32>
    %79 = vector.shape_cast %78 : vector<8xf32> to vector<8x1xf32>
    %80 = vector.broadcast %79 : vector<8x1xf32> to vector<8x8xf32>
    %81 = arith.subf %77, %80 : vector<8x8xf32>
    %82 = math.exp %81 : vector<8x8xf32>
    %cst_27 = arith.constant dense<0.000000e+00> : vector<8xf32>
    %83 = vector.multi_reduction <add>, %82, %cst_27 [1] : vector<8x8xf32> to vector<8xf32>
    %84 = vector.shape_cast %83 : vector<8xf32> to vector<8x1xf32>
    %85 = vector.broadcast %84 : vector<8x1xf32> to vector<8x8xf32>
    %86 = arith.divf %82, %85 : vector<8x8xf32>
    %cst_28 = arith.constant dense<0.000000e+00> : vector<8x8xf32>
    %87 = tpu.matmul %86, %74, %cst_28 {dimension_numbers = #tpu.dot_dimension_numbers<[1], [0], [0], [1], [0, 0, 1, 1], [], []>} : vector<8x8xf32>, vector<8x8xf32>, vector<8x8xf32> -> vector<8x8xf32>
    %88 = vector.extract_strided_slice %4 {offsets = [24, 0], sizes = [8, 32], strides = [1, 1]} : vector<32x32xf32> to vector<8x32xf32>
    %cst_29 = arith.constant dense<0.000000e+00> : vector<8x32xf32>
    %89 = tpu.matmul %87, %88, %cst_29 {dimension_numbers = #tpu.dot_dimension_numbers<[1], [0], [0], [1], [0, 0, 1, 1], [], []>} : vector<8x8xf32>, vector<8x32xf32>, vector<8x32xf32> -> vector<8x32xf32>
    %90 = arith.addf %70, %89 : vector<8x32xf32>
    %91 = vector.broadcast %5 : vector<1x32xf32> to vector<8x32xf32>
    %92 = arith.addf %90, %91 : vector<8x32xf32>
    %c0_30 = arith.constant 0 : index
    %c0_31 = arith.constant 0 : index
    %93 = vector.load %arg3[%c0_30, %c0_31] : memref<16x32xf32, #tpu.memory_space<vmem>>, vector<8x32xf32>
    tpu.vector_store %arg3[%c0_30, %c0_31], %92 {strides = array<i32>} : memref<16x32xf32, #tpu.memory_space<vmem>>, vector<8x32xf32>,
    %94 = vector.extract_strided_slice %2 {offsets = [8, 0], sizes = [8, 96], strides = [1, 1]} : vector<16x96xf32> to vector<8x96xf32>
    %cst_32 = arith.constant 0.000000e+00 : f32
    %95 = vector.broadcast %cst_32 : f32 to vector<8x32xf32>
    %96 = vector.extract_strided_slice %94 {offsets = [0, 0], sizes = [8, 24], strides = [1, 1]} : vector<8x96xf32> to vector<8x24xf32>
    %97 = vector.extract_strided_slice %96 {offsets = [0, 0], sizes = [8, 8], strides = [1, 1]} : vector<8x24xf32> to vector<8x8xf32>
    %98 = vector.extract_strided_slice %96 {offsets = [0, 8], sizes = [8, 8], strides = [1, 1]} : vector<8x24xf32> to vector<8x8xf32>
    %99 = vector.extract_strided_slice %96 {offsets = [0, 16], sizes = [8, 8], strides = [1, 1]} : vector<8x24xf32> to vector<8x8xf32>
    %cst_33 = arith.constant dense<0.000000e+00> : vector<8x8xf32>
    %100 = tpu.matmul %97, %98, %cst_33 {dimension_numbers = #tpu.dot_dimension_numbers<[1], [1], [0], [0], [0, 0, 1, 0], [], []>} : vector<8x8xf32>, vector<8x8xf32>, vector<8x8xf32> -> vector<8x8xf32>
    %cst_34 = arith.constant -1.000000e+30 : f32
    %101 = vector.broadcast %cst_34 : f32 to vector<8x8xf32>
    %102 = arith.select %8, %101, %100 : vector<8x8xi1>, vector<8x8xf32>
    %cst_35 = arith.constant dense<0xFF800000> : vector<8xf32>
    %103 = vector.multi_reduction <maximumf>, %102, %cst_35 [1] : vector<8x8xf32> to vector<8xf32>
    %104 = vector.shape_cast %103 : vector<8xf32> to vector<8x1xf32>
    %105 = vector.broadcast %104 : vector<8x1xf32> to vector<8x8xf32>
    %106 = arith.subf %102, %105 : vector<8x8xf32>
    %107 = math.exp %106 : vector<8x8xf32>
    %cst_36 = arith.constant dense<0.000000e+00> : vector<8xf32>
    %108 = vector.multi_reduction <add>, %107, %cst_36 [1] : vector<8x8xf32> to vector<8xf32>
    %109 = vector.shape_cast %108 : vector<8xf32> to vector<8x1xf32>
    %110 = vector.broadcast %109 : vector<8x1xf32> to vector<8x8xf32>
    %111 = arith.divf %107, %110 : vector<8x8xf32>
    %cst_37 = arith.constant dense<0.000000e+00> : vector<8x8xf32>
    %112 = tpu.matmul %111, %99, %cst_37 {dimension_numbers = #tpu.dot_dimension_numbers<[1], [0], [0], [1], [0, 0, 1, 1], [], []>} : vector<8x8xf32>, vector<8x8xf32>, vector<8x8xf32> -> vector<8x8xf32>
    %113 = vector.extract_strided_slice %4 {offsets = [0, 0], sizes = [8, 32], strides = [1, 1]} : vector<32x32xf32> to vector<8x32xf32>
    %cst_38 = arith.constant dense<0.000000e+00> : vector<8x32xf32>
    %114 = tpu.matmul %112, %113, %cst_38 {dimension_numbers = #tpu.dot_dimension_numbers<[1], [0], [0], [1], [0, 0, 1, 1], [], []>} : vector<8x8xf32>, vector<8x32xf32>, vector<8x32xf32> -> vector<8x32xf32>
    %115 = arith.addf %95, %114 : vector<8x32xf32>
    %116 = vector.extract_strided_slice %94 {offsets = [0, 24], sizes = [8, 24], strides = [1, 1]} : vector<8x96xf32> to vector<8x24xf32>
    %117 = vector.extract_strided_slice %116 {offsets = [0, 0], sizes = [8, 8], strides = [1, 1]} : vector<8x24xf32> to vector<8x8xf32>
    %118 = vector.extract_strided_slice %116 {offsets = [0, 8], sizes = [8, 8], strides = [1, 1]} : vector<8x24xf32> to vector<8x8xf32>
    %119 = vector.extract_strided_slice %116 {offsets = [0, 16], sizes = [8, 8], strides = [1, 1]} : vector<8x24xf32> to vector<8x8xf32>
    %cst_39 = arith.constant dense<0.000000e+00> : vector<8x8xf32>
    %120 = tpu.matmul %117, %118, %cst_39 {dimension_numbers = #tpu.dot_dimension_numbers<[1], [1], [0], [0], [0, 0, 1, 0], [], []>} : vector<8x8xf32>, vector<8x8xf32>, vector<8x8xf32> -> vector<8x8xf32>
    %cst_40 = arith.constant -1.000000e+30 : f32
    %121 = vector.broadcast %cst_40 : f32 to vector<8x8xf32>
    %122 = arith.select %8, %121, %120 : vector<8x8xi1>, vector<8x8xf32>
    %cst_41 = arith.constant dense<0xFF800000> : vector<8xf32>
    %123 = vector.multi_reduction <maximumf>, %122, %cst_41 [1] : vector<8x8xf32> to vector<8xf32>
    %124 = vector.shape_cast %123 : vector<8xf32> to vector<8x1xf32>
    %125 = vector.broadcast %124 : vector<8x1xf32> to vector<8x8xf32>
    %126 = arith.subf %122, %125 : vector<8x8xf32>
    %127 = math.exp %126 : vector<8x8xf32>
    %cst_42 = arith.constant dense<0.000000e+00> : vector<8xf32>
    %128 = vector.multi_reduction <add>, %127, %cst_42 [1] : vector<8x8xf32> to vector<8xf32>
    %129 = vector.shape_cast %128 : vector<8xf32> to vector<8x1xf32>
    %130 = vector.broadcast %129 : vector<8x1xf32> to vector<8x8xf32>
    %131 = arith.divf %127, %130 : vector<8x8xf32>
    %cst_43 = arith.constant dense<0.000000e+00> : vector<8x8xf32>
    %132 = tpu.matmul %131, %119, %cst_43 {dimension_numbers = #tpu.dot_dimension_numbers<[1], [0], [0], [1], [0, 0, 1, 1], [], []>} : vector<8x8xf32>, vector<8x8xf32>, vector<8x8xf32> -> vector<8x8xf32>
    %133 = vector.extract_strided_slice %4 {offsets = [8, 0], sizes = [8, 32], strides = [1, 1]} : vector<32x32xf32> to vector<8x32xf32>
    %cst_44 = arith.constant dense<0.000000e+00> : vector<8x32xf32>
    %134 = tpu.matmul %132, %133, %cst_44 {dimension_numbers = #tpu.dot_dimension_numbers<[1], [0], [0], [1], [0, 0, 1, 1], [], []>} : vector<8x8xf32>, vector<8x32xf32>, vector<8x32xf32> -> vector<8x32xf32>
    %135 = arith.addf %115, %134 : vector<8x32xf32>
    %136 = vector.extract_strided_slice %94 {offsets = [0, 48], sizes = [8, 24], strides = [1, 1]} : vector<8x96xf32> to vector<8x24xf32>
    %137 = vector.extract_strided_slice %136 {offsets = [0, 0], sizes = [8, 8], strides = [1, 1]} : vector<8x24xf32> to vector<8x8xf32>
    %138 = vector.extract_strided_slice %136 {offsets = [0, 8], sizes = [8, 8], strides = [1, 1]} : vector<8x24xf32> to vector<8x8xf32>
    %139 = vector.extract_strided_slice %136 {offsets = [0, 16], sizes = [8, 8], strides = [1, 1]} : vector<8x24xf32> to vector<8x8xf32>
    %cst_45 = arith.constant dense<0.000000e+00> : vector<8x8xf32>
    %140 = tpu.matmul %137, %138, %cst_45 {dimension_numbers = #tpu.dot_dimension_numbers<[1], [1], [0], [0], [0, 0, 1, 0], [], []>} : vector<8x8xf32>, vector<8x8xf32>, vector<8x8xf32> -> vector<8x8xf32>
    %cst_46 = arith.constant -1.000000e+30 : f32
    %141 = vector.broadcast %cst_46 : f32 to vector<8x8xf32>
    %142 = arith.select %8, %141, %140 : vector<8x8xi1>, vector<8x8xf32>
    %cst_47 = arith.constant dense<0xFF800000> : vector<8xf32>
    %143 = vector.multi_reduction <maximumf>, %142, %cst_47 [1] : vector<8x8xf32> to vector<8xf32>
    %144 = vector.shape_cast %143 : vector<8xf32> to vector<8x1xf32>
    %145 = vector.broadcast %144 : vector<8x1xf32> to vector<8x8xf32>
    %146 = arith.subf %142, %145 : vector<8x8xf32>
    %147 = math.exp %146 : vector<8x8xf32>
    %cst_48 = arith.constant dense<0.000000e+00> : vector<8xf32>
    %148 = vector.multi_reduction <add>, %147, %cst_48 [1] : vector<8x8xf32> to vector<8xf32>
    %149 = vector.shape_cast %148 : vector<8xf32> to vector<8x1xf32>
    %150 = vector.broadcast %149 : vector<8x1xf32> to vector<8x8xf32>
    %151 = arith.divf %147, %150 : vector<8x8xf32>
    %cst_49 = arith.constant dense<0.000000e+00> : vector<8x8xf32>
    %152 = tpu.matmul %151, %139, %cst_49 {dimension_numbers = #tpu.dot_dimension_numbers<[1], [0], [0], [1], [0, 0, 1, 1], [], []>} : vector<8x8xf32>, vector<8x8xf32>, vector<8x8xf32> -> vector<8x8xf32>
    %153 = vector.extract_strided_slice %4 {offsets = [16, 0], sizes = [8, 32], strides = [1, 1]} : vector<32x32xf32> to vector<8x32xf32>
    %cst_50 = arith.constant dense<0.000000e+00> : vector<8x32xf32>
    %154 = tpu.matmul %152, %153, %cst_50 {dimension_numbers = #tpu.dot_dimension_numbers<[1], [0], [0], [1], [0, 0, 1, 1], [], []>} : vector<8x8xf32>, vector<8x32xf32>, vector<8x32xf32> -> vector<8x32xf32>
    %155 = arith.addf %135, %154 : vector<8x32xf32>
    %156 = vector.extract_strided_slice %94 {offsets = [0, 72], sizes = [8, 24], strides = [1, 1]} : vector<8x96xf32> to vector<8x24xf32>
    %157 = vector.extract_strided_slice %156 {offsets = [0, 0], sizes = [8, 8], strides = [1, 1]} : vector<8x24xf32> to vector<8x8xf32>
    %158 = vector.extract_strided_slice %156 {offsets = [0, 8], sizes = [8, 8], strides = [1, 1]} : vector<8x24xf32> to vector<8x8xf32>
    %159 = vector.extract_strided_slice %156 {offsets = [0, 16], sizes = [8, 8], strides = [1, 1]} : vector<8x24xf32> to vector<8x8xf32>
    %cst_51 = arith.constant dense<0.000000e+00> : vector<8x8xf32>
    %160 = tpu.matmul %157, %158, %cst_51 {dimension_numbers = #tpu.dot_dimension_numbers<[1], [1], [0], [0], [0, 0, 1, 0], [], []>} : vector<8x8xf32>, vector<8x8xf32>, vector<8x8xf32> -> vector<8x8xf32>
    %cst_52 = arith.constant -1.000000e+30 : f32
    %161 = vector.broadcast %cst_52 : f32 to vector<8x8xf32>
    %162 = arith.select %8, %161, %160 : vector<8x8xi1>, vector<8x8xf32>
    %cst_53 = arith.constant dense<0xFF800000> : vector<8xf32>
    %163 = vector.multi_reduction <maximumf>, %162, %cst_53 [1] : vector<8x8xf32> to vector<8xf32>
    %164 = vector.shape_cast %163 : vector<8xf32> to vector<8x1xf32>
    %165 = vector.broadcast %164 : vector<8x1xf32> to vector<8x8xf32>
    %166 = arith.subf %162, %165 : vector<8x8xf32>
    %167 = math.exp %166 : vector<8x8xf32>
    %cst_54 = arith.constant dense<0.000000e+00> : vector<8xf32>
    %168 = vector.multi_reduction <add>, %167, %cst_54 [1] : vector<8x8xf32> to vector<8xf32>
    %169 = vector.shape_cast %168 : vector<8xf32> to vector<8x1xf32>
    %170 = vector.broadcast %169 : vector<8x1xf32> to vector<8x8xf32>
    %171 = arith.divf %167, %170 : vector<8x8xf32>
    %cst_55 = arith.constant dense<0.000000e+00> : vector<8x8xf32>
    %172 = tpu.matmul %171, %159, %cst_55 {dimension_numbers = #tpu.dot_dimension_numbers<[1], [0], [0], [1], [0, 0, 1, 1], [], []>} : vector<8x8xf32>, vector<8x8xf32>, vector<8x8xf32> -> vector<8x8xf32>
    %173 = vector.extract_strided_slice %4 {offsets = [24, 0], sizes = [8, 32], strides = [1, 1]} : vector<32x32xf32> to vector<8x32xf32>
    %cst_56 = arith.constant dense<0.000000e+00> : vector<8x32xf32>
    %174 = tpu.matmul %172, %173, %cst_56 {dimension_numbers = #tpu.dot_dimension_numbers<[1], [0], [0], [1], [0, 0, 1, 1], [], []>} : vector<8x8xf32>, vector<8x32xf32>, vector<8x32xf32> -> vector<8x32xf32>
    %175 = arith.addf %155, %174 : vector<8x32xf32>
    %176 = vector.broadcast %5 : vector<1x32xf32> to vector<8x32xf32>
    %177 = arith.addf %175, %176 : vector<8x32xf32>
    %c8 = arith.constant 8 : index
    %c0_57 = arith.constant 0 : index
    %178 = vector.load %arg3[%c8, %c0_57] : memref<16x32xf32, #tpu.memory_space<vmem>>, vector<8x32xf32>
    tpu.vector_store %arg3[%c8, %c0_57], %177 {strides = array<i32>} : memref<16x32xf32, #tpu.memory_space<vmem>>, vector<8x32xf32>,
    return
  }
}

</mosaic_0001>

<llo_original>
// kernel: tpu_custom_call.1
$region0: #{tpu_custom_call.1}
  #allocation0 [shape = 'u32[]', space=smem, size = 0x4, offset = 0x4, fixed_abs, tag = 'smem constant byte address 0x4 - core index']
  #allocation1 [shape = 'u32[144,128]{1,0:T(1,128)}', space=vmem, size = 0x12000, scoped, tag = 'internal scratch']
  %s0 = inlined_call_operand.vmem [shape: f32[16,32], index: 0, kind: input, shape index: {}]
  %s1 = inlined_call_operand.vmem [shape: f32[32,96], index: 1, kind: input, shape index: {}]
  %s2 = inlined_call_operand.vmem [shape: f32[33,32], index: 2, kind: input, shape index: {}]
  %s3 = inlined_call_operand.hbm [shape: f32[16,32], index: 3, kind: output, shape index: {}]
  %s4 = sld [smem:[#allocation0]]
  $region22: #{tpu_custom_call.1} parent=0
    _
  %s6 = ssub.s32 1, %s4
  %s7 = scalar_select 0, %s6, %s4
  $region1: #{tpu_custom_call.1} parent=0
    #allocation2 [shape = 'u8[8192]{0}', space=vmem, size = 0x2000, scoped, tag = 'output window, operand 0, single buffered']
    #allocation3 [shape = 's32[1]{0}', space=sflag, size = 0x4, scoped, tag = 'scoped memory for tpu_custom_call.1']
    %8 = vsyncpa [#allocation3], 0
    // Predicated region
    $region2: #{tpu_custom_call.1} parent=1 // pred_check
      _
    $region3: #{tpu_custom_call.1} parent=1 // pred_check_branch
      %10 = sbr.rel (0) target = $region5
    $region4: #{tpu_custom_call.1} parent=1 // pred_region
      _
    $region5: #{tpu_custom_call.1} parent=1 // pred_fallthru
      _
    // Predicated region
    $region6: #{tpu_custom_call.1} parent=1 // pred_check
      _
    $region7: #{tpu_custom_call.1} parent=1 // pred_check_branch
      %12 = sbr.rel (0) target = $region9
    $region8: #{tpu_custom_call.1} parent=1 // pred_region
      _
    $region9: #{tpu_custom_call.1} parent=1 // pred_fallthru
      _
    // Predicated region
    $region10: #{tpu_custom_call.1} parent=1 // pred_check
      _
    $region11: #{tpu_custom_call.1} parent=1 // pred_check_branch
      %14 = sbr.rel (0) target = $region13
    $region12: #{tpu_custom_call.1} parent=1 // pred_region
      _
    $region13: #{tpu_custom_call.1} parent=1 // pred_fallthru
      _
    %v15 = vld [vmem:[%s0] sm:$0xff]
    %v16 = vld [vmem:[%s0 + $0x8] sm:$0xff]
    %v17 = vld [vmem:[%s1] sm:$0xff]
    %v18 = vld [vmem:[%s1 + $0x8] sm:$0xff]
    %v19 = vld [vmem:[%s1 + $0x10] sm:$0xff]
    %v20 = vld [vmem:[%s1 + $0x18] sm:$0xff]
    %vm21 = vcmask 261120
    %v23 = vsel %vm21, %v15, 0
    %v26 = vsel %vm21, %v16, 0
    %28 = vmatprep.subr.mxu0 0.0
    %29 = vmatpush1.msra.mxu0 %v17
    %30 = vmatprep.subr.mxu0 0.0
    %31 = vmatpush1.msra.mxu0 %v18
    %32 = vmatprep.subr.mxu0 0.0
    %33 = vmatpush1.msra.mxu0 %v19
    %34 = vmatprep.subr.mxu0 0.0
    %35 = vmatpush1.msra.mxu0 %v20
    %36 = vmatprep.subr.mxu0 0.0
    %37 = vmatpush1.msra.mxu0 0.0
    %38 = vmatprep.subr.mxu0 0.0
    %39 = vmatpush1.msra.mxu0 0.0
    %40 = vmatprep.subr.mxu0 0.0
    %41 = vmatpush1.msra.mxu0 0.0
    %42 = vmatprep.subr.mxu0 0.0
    %43 = vmatpush1.msra.mxu0 0.0
    %44 = vmatprep.subr.mxu0 0.0
    %45 = vmatpush1.msra.mxu0 0.0
    %46 = vmatprep.subr.mxu0 0.0
    %47 = vmatpush1.msra.mxu0 0.0
    %48 = vmatprep.subr.mxu0 0.0
    %49 = vmatpush1.msra.mxu0 0.0
    %50 = vmatprep.subr.mxu0 0.0
    %51 = vmatpush1.msra.mxu0 0.0
    %52 = vmatprep.subr.mxu0 0.0
    %53 = vmatpush1.msra.mxu0 0.0
    %54 = vmatprep.subr.mxu0 0.0
    %55 = vmatpush1.msra.mxu0 0.0
    %56 = vmatprep.subr.mxu0 0.0
    %57 = vmatpush1.msra.mxu0 0.0
    %58 = vmatprep.subr.mxu0 0.0
    %59 = vmatpush1.msra.mxu0 0.0
    %60 = vmatprep.subr.mxu0 0.0
    %61 = vmatpush1.msra.mxu0 0.0
    %62 = vmatprep.subr.mxu0 0.0
    %63 = vmatpush1.msra.mxu0 0.0
    %64 = vmatprep.subr.mxu0 0.0
    %65 = vmatpush1.msra.mxu0 0.0
    %66 = vmatprep.subr.mxu0 0.0
    %67 = vmatpush1.msra.mxu0 0.0
    %68 = vmatprep.subr.mxu0 0.0
    %69 = vmatpush1.msra.mxu0 0.0
    %70 = vmatprep.subr.mxu0 0.0
    %71 = vmatpush1.msra.mxu0 0.0
    %72 = vmatprep.subr.mxu0 0.0
    %73 = vmatpush1.msra.mxu0 0.0
    %74 = vmatprep.subr.mxu0 0.0
    %75 = vmatpush1.msra.mxu0 0.0
    %76 = vmatprep.subr.mxu0 0.0
    %77 = vmatpush1.msra.mxu0 0.0
    %78 = vmatprep.subr.mxu0 0.0
    %79 = vmatpush1.msra.mxu0 0.0
    %80 = vmatprep.subr.mxu0 0.0
    %81 = vmatpush1.msra.mxu0 0.0
    %82 = vmatprep.subr.mxu0 0.0
    %83 = vmatpush1.msra.mxu0 0.0
    %84 = vmatprep.subr.mxu0 0.0
    %85 = vmatpush1.msra.mxu0 0.0
    %86 = vmatprep.subr.mxu0 0.0
    %87 = vmatpush1.msra.mxu0 0.0
    %88 = vmatprep.subr.mxu0 0.0
    %89 = vmatpush1.msra.mxu0 0.0
    %90 = vmatprep.subr.mxu0 0.0
    %91 = vmatpush1.msra.mxu0 0.0
    %92 = vmatprep.mubr.f32.mxu0 0.0
    %93 = vmatmul.mubr.f32.gmra.mrb[0].mxu0 %v23
    %v94 = vpop.f32.mrb[0].mxu0
    %v95 = vadd.f32 0.0, %v94
    %v96 = vpop.f32.mrb[0].mxu0
    %97 = vmatprep.mubr.f32.mxu0 0.0
    %98 = vmatmul.mubr.f32.gmra.mrb[0].mxu0 %v26
    %v99 = vpop.f32.mrb[0].mxu0
    %v100 = vadd.f32 0.0, %v99
    %v101 = vpop.f32.mrb[0].mxu0
    %102 = vdwg.mxu0
    %v103 = vld [vmem:[%s2] sm:$0xff]
    %v104 = vld [vmem:[%s2 + $0x8] sm:$0xff]
    %v105 = vld [vmem:[%s2 + $0x10] sm:$0xff]
    %v106 = vld [vmem:[%s2 + $0x18] sm:$0xff]
    %v107 = vld [vmem:[%s2 + $0x20] sm:$0x1]
    %v108 = vlaneseq
    %v109 = vshrl.u32 %v108, 7
    %v110 = vlaneseq
    %v111 = vand.u32 %v110, 127
    %vm112 = vcmp.gt.s32.totalorder %v111, %v109
    %114 = vrot.lane.b32.xlu0 %v95, 120
    %v115 = vpop.permute.xlu0 %114
    %vm116 = vcmask 64512
    %v117 = vsel %vm116, %v95, 0
    %v119 = vsel %vm116, %v115, 0
    %121 = vmatprep.subr.mxu0 0.0
    %122 = vmatpush1.xpose.msra.mxu0 %v119
    %123 = vmatprep.subr.mxu0 0.0
    %124 = vmatpush1.xpose.msra.mxu0 0.0
    %125 = vmatprep.subr.mxu0 0.0
    %126 = vmatpush1.xpose.msra.mxu0 0.0
    %127 = vmatprep.subr.mxu0 0.0
    %128 = vmatpush1.xpose.msra.mxu0 0.0
    %129 = vmatprep.subr.mxu0 0.0
    %130 = vmatpush1.xpose.msra.mxu0 0.0
    %131 = vmatprep.subr.mxu0 0.0
    %132 = vmatpush1.xpose.msra.mxu0 0.0
    %133 = vmatprep.subr.mxu0 0.0
    %134 = vmatpush1.xpose.msra.mxu0 0.0
    %135 = vmatprep.subr.mxu0 0.0
    %136 = vmatpush1.xpose.msra.mxu0 0.0
    %137 = vmatprep.subr.mxu0 0.0
    %138 = vmatpush1.xpose.msra.mxu0 0.0
    %139 = vmatprep.subr.mxu0 0.0
    %140 = vmatpush1.xpose.msra.mxu0 0.0
    %141 = vmatprep.subr.mxu0 0.0
    %142 = vmatpush1.xpose.msra.mxu0 0.0
    %143 = vmatprep.subr.mxu0 0.0
    %144 = vmatpush1.xpose.msra.mxu0 0.0
    %145 = vmatprep.subr.mxu0 0.0
    %146 = vmatpush1.xpose.msra.mxu0 0.0
    %147 = vmatprep.subr.mxu0 0.0
    %148 = vmatpush1.xpose.msra.mxu0 0.0
    %149 = vmatprep.subr.mxu0 0.0
    %150 = vmatpush1.xpose.msra.mxu0 0.0
    %151 = vmatprep.subr.mxu0 0.0
    %152 = vmatpush1.xpose.msra.mxu0 0.0
    %153 = vmatprep.subr.mxu0 0.0
    %154 = vmatpush1.xpose.msra.mxu0 0.0
    %155 = vmatprep.subr.mxu0 0.0
    %156 = vmatpush1.xpose.msra.mxu0 0.0
    %157 = vmatprep.subr.mxu0 0.0
    %158 = vmatpush1.xpose.msra.mxu0 0.0
    %159 = vmatprep.subr.mxu0 0.0
    %160 = vmatpush1.xpose.msra.mxu0 0.0
    %161 = vmatprep.subr.mxu0 0.0
    %162 = vmatpush1.xpose.msra.mxu0 0.0
    %163 = vmatprep.subr.mxu0 0.0
    %164 = vmatpush1.xpose.msra.mxu0 0.0
    %165 = vmatprep.subr.mxu0 0.0
    %166 = vmatpush1.xpose.msra.mxu0 0.0
    %167 = vmatprep.subr.mxu0 0.0
    %168 = vmatpush1.xpose.msra.mxu0 0.0
    %169 = vmatprep.subr.mxu0 0.0
    %170 = vmatpush1.xpose.msra.mxu0 0.0
    %171 = vmatprep.subr.mxu0 0.0
    %172 = vmatpush1.xpose.msra.mxu0 0.0
    %173 = vmatprep.subr.mxu0 0.0
    %174 = vmatpush1.xpose.msra.mxu0 0.0
    %175 = vmatprep.subr.mxu0 0.0
    %176 = vmatpush1.xpose.msra.mxu0 0.0
    %177 = vmatprep.subr.mxu0 0.0
    %178 = vmatpush1.xpose.msra.mxu0 0.0
    %179 = vmatprep.subr.mxu0 0.0
    %180 = vmatpush1.xpose.msra.mxu0 0.0
    %181 = vmatprep.subr.mxu0 0.0
    %182 = vmatpush1.xpose.msra.mxu0 0.0
    %183 = vmatprep.subr.mxu0 0.0
    %184 = vmatpush1.xpose.msra.mxu0 0.0
    %185 = vmatprep.mubr.f32.mxu0 0.0
    %186 = vmatmul.mubr.f32.gmra.mrb[0].mxu0 %v117
    %v187 = vpop.f32.mrb[0].mxu0
    %v188 = vadd.f32 0.0, %v187
    %v189 = vpop.f32.mrb[0].mxu0
    %190 = vdwg.mxu0
    %v191 = vsel %vm112, -1e+30, %v188
    %v192 = vsel %vm116, %v191, -inf
    %193 = vmax.xlane.f32.xlu0 %v192
    %v194 = vpop.xlane.xlu0 %193
    %v195 = vsub.f32 %v191, %v194
    %v196 = vmul.f32 %v195, 1.442695
    %v197 = vpow.pop %v196
    %v198 = vsel %vm116, %v197, 0.0
    %199 = vadd.xlane.f32.xlu0 %v198
    %v200 = vpop.xlane.xlu0 %199
    %v201 = vrcp.pop %v200
    %v202 = vmul.f32 %v197, %v201
    %203 = vrot.lane.b32.xlu0 %v95, 112
    %v204 = vpop.permute.xlu0 %203
    %v207 = vsel %vm116, %v202, 0
    %209 = vmatprep.subr.mxu0 0.0
    %210 = vmatpush1.msra.mxu0 %v204
    %211 = vmatprep.subr.mxu0 0.0
    %212 = vmatpush1.msra.mxu0 0.0
    %213 = vmatprep.subr.mxu0 0.0
    %214 = vmatpush1.msra.mxu0 0.0
    %215 = vmatprep.subr.mxu0 0.0
    %216 = vmatpush1.msra.mxu0 0.0
    %217 = vmatprep.subr.mxu0 0.0
    %218 = vmatpush1.msra.mxu0 0.0
    %219 = vmatprep.subr.mxu0 0.0
    %220 = vmatpush1.msra.mxu0 0.0
    %221 = vmatprep.subr.mxu0 0.0
    %222 = vmatpush1.msra.mxu0 0.0
    %223 = vmatprep.subr.mxu0 0.0
    %224 = vmatpush1.msra.mxu0 0.0
    %225 = vmatprep.subr.mxu0 0.0
    %226 = vmatpush1.msra.mxu0 0.0
    %227 = vmatprep.subr.mxu0 0.0
    %228 = vmatpush1.msra.mxu0 0.0
    %229 = vmatprep.subr.mxu0 0.0
    %230 = vmatpush1.msra.mxu0 0.0
    %231 = vmatprep.subr.mxu0 0.0
    %232 = vmatpush1.msra.mxu0 0.0
    %233 = vmatprep.subr.mxu0 0.0
    %234 = vmatpush1.msra.mxu0 0.0
    %235 = vmatprep.subr.mxu0 0.0
    %236 = vmatpush1.msra.mxu0 0.0
    %237 = vmatprep.subr.mxu0 0.0
    %238 = vmatpush1.msra.mxu0 0.0
    %239 = vmatprep.subr.mxu0 0.0
    %240 = vmatpush1.msra.mxu0 0.0
    %241 = vmatprep.subr.mxu0 0.0
    %242 = vmatpush1.msra.mxu0 0.0
    %243 = vmatprep.subr.mxu0 0.0
    %244 = vmatpush1.msra.mxu0 0.0
    %245 = vmatprep.subr.mxu0 0.0
    %246 = vmatpush1.msra.mxu0 0.0
    %247 = vmatprep.subr.mxu0 0.0
    %248 = vmatpush1.msra.mxu0 0.0
    %249 = vmatprep.subr.mxu0 0.0
    %250 = vmatpush1.msra.mxu0 0.0
    %251 = vmatprep.subr.mxu0 0.0
    %252 = vmatpush1.msra.mxu0 0.0
    %253 = vmatprep.subr.mxu0 0.0
    %254 = vmatpush1.msra.mxu0 0.0
    %255 = vmatprep.subr.mxu0 0.0
    %256 = vmatpush1.msra.mxu0 0.0
    %257 = vmatprep.subr.mxu0 0.0
    %258 = vmatpush1.msra.mxu0 0.0
    %259 = vmatprep.subr.mxu0 0.0
    %260 = vmatpush1.msra.mxu0 0.0
    %261 = vmatprep.subr.mxu0 0.0
    %262 = vmatpush1.msra.mxu0 0.0
    %263 = vmatprep.subr.mxu0 0.0
    %264 = vmatpush1.msra.mxu0 0.0
    %265 = vmatprep.subr.mxu0 0.0
    %266 = vmatpush1.msra.mxu0 0.0
    %267 = vmatprep.subr.mxu0 0.0
    %268 = vmatpush1.msra.mxu0 0.0
    %269 = vmatprep.subr.mxu0 0.0
    %270 = vmatpush1.msra.mxu0 0.0
    %271 = vmatprep.subr.mxu0 0.0
    %272 = vmatpush1.msra.mxu0 0.0
    %273 = vmatprep.mubr.f32.mxu0 0.0
    %274 = vmatmul.mubr.f32.gmra.mrb[0].mxu0 %v207
    %v275 = vpop.f32.mrb[0].mxu0
    %v276 = vadd.f32 0.0, %v275
    %v277 = vpop.f32.mrb[0].mxu0
    %278 = vdwg.mxu0
    %279 = vrot.lane.b32.xlu0 %v95, 104
    %v280 = vpop.permute.xlu0 %279
    %281 = vrot.lane.b32.xlu0 %v95, 96
    %v282 = vpop.permute.xlu0 %281
    %v283 = vsel %vm116, %v280, 0
    %v285 = vsel %vm116, %v282, 0
    %287 = vmatprep.subr.mxu0 0.0
    %288 = vmatpush1.xpose.msra.mxu0 %v285
    %289 = vmatprep.subr.mxu0 0.0
    %290 = vmatpush1.xpose.msra.mxu0 0.0
    %291 = vmatprep.subr.mxu0 0.0
    %292 = vmatpush1.xpose.msra.mxu0 0.0
    %293 = vmatprep.subr.mxu0 0.0
    %294 = vmatpush1.xpose.msra.mxu0 0.0
    %295 = vmatprep.subr.mxu0 0.0
    %296 = vmatpush1.xpose.msra.mxu0 0.0
    %297 = vmatprep.subr.mxu0 0.0
    %298 = vmatpush1.xpose.msra.mxu0 0.0
    %299 = vmatprep.subr.mxu0 0.0
    %300 = vmatpush1.xpose.msra.mxu0 0.0
    %301 = vmatprep.subr.mxu0 0.0
    %302 = vmatpush1.xpose.msra.mxu0 0.0
    %303 = vmatprep.subr.mxu0 0.0
    %304 = vmatpush1.xpose.msra.mxu0 0.0
    %305 = vmatprep.subr.mxu0 0.0
    %306 = vmatpush1.xpose.msra.mxu0 0.0
    %307 = vmatprep.subr.mxu0 0.0
    %308 = vmatpush1.xpose.msra.mxu0 0.0
    %309 = vmatprep.subr.mxu0 0.0
    %310 = vmatpush1.xpose.msra.mxu0 0.0
    %311 = vmatprep.subr.mxu0 0.0
    %312 = vmatpush1.xpose.msra.mxu0 0.0
    %313 = vmatprep.subr.mxu0 0.0
    %314 = vmatpush1.xpose.msra.mxu0 0.0
    %315 = vmatprep.subr.mxu0 0.0
    %316 = vmatpush1.xpose.msra.mxu0 0.0
    %317 = vmatprep.subr.mxu0 0.0
    %318 = vmatpush1.xpose.msra.mxu0 0.0
    %319 = vmatprep.subr.mxu0 0.0
    %320 = vmatpush1.xpose.msra.mxu0 0.0
    %321 = vmatprep.subr.mxu0 0.0
    %322 = vmatpush1.xpose.msra.mxu0 0.0
    %323 = vmatprep.subr.mxu0 0.0
    %324 = vmatpush1.xpose.msra.mxu0 0.0
    %325 = vmatprep.subr.mxu0 0.0
    %326 = vmatpush1.xpose.msra.mxu0 0.0
    %327 = vmatprep.subr.mxu0 0.0
    %328 = vmatpush1.xpose.msra.mxu0 0.0
    %329 = vmatprep.subr.mxu0 0.0
    %330 = vmatpush1.xpose.msra.mxu0 0.0
    %331 = vmatprep.subr.mxu0 0.0
    %332 = vmatpush1.xpose.msra.mxu0 0.0
    %333 = vmatprep.subr.mxu0 0.0
    %334 = vmatpush1.xpose.msra.mxu0 0.0
    %335 = vmatprep.subr.mxu0 0.0
    %336 = vmatpush1.xpose.msra.mxu0 0.0
    %337 = vmatprep.subr.mxu0 0.0
    %338 = vmatpush1.xpose.msra.mxu0 0.0
    %339 = vmatprep.subr.mxu0 0.0
    %340 = vmatpush1.xpose.msra.mxu0 0.0
    %341 = vmatprep.subr.mxu0 0.0
    %342 = vmatpush1.xpose.msra.mxu0 0.0
    %343 = vmatprep.subr.mxu0 0.0
    %344 = vmatpush1.xpose.msra.mxu0 0.0
    %345 = vmatprep.subr.mxu0 0.0
    %346 = vmatpush1.xpose.msra.mxu0 0.0
    %347 = vmatprep.subr.mxu0 0.0
    %348 = vmatpush1.xpose.msra.mxu0 0.0
    %349 = vmatprep.subr.mxu0 0.0
    %350 = vmatpush1.xpose.msra.mxu0 0.0
    %351 = vmatprep.mubr.f32.mxu0 0.0
    %352 = vmatmul.mubr.f32.gmra.mrb[0].mxu0 %v283
    %v353 = vpop.f32.mrb[0].mxu0
    %v354 = vadd.f32 0.0, %v353
    %v355 = vpop.f32.mrb[0].mxu0
    %356 = vdwg.mxu0
    %v357 = vsel %vm112, -1e+30, %v354
    %v358 = vsel %vm116, %v357, -inf
    %359 = vmax.xlane.f32.xlu0 %v358
    %v360 = vpop.xlane.xlu0 %359
    %v361 = vsub.f32 %v357, %v360
    %v362 = vmul.f32 %v361, 1.442695
    %v363 = vpow.pop %v362
    %v364 = vsel %vm116, %v363, 0.0
    %365 = vadd.xlane.f32.xlu0 %v364
    %v366 = vpop.xlane.xlu0 %365
    %v367 = vrcp.pop %v366
    %v368 = vmul.f32 %v363, %v367
    %369 = vrot.lane.b32.xlu0 %v95, 88
    %v370 = vpop.permute.xlu0 %369
    %v373 = vsel %vm116, %v368, 0
    %375 = vmatprep.subr.mxu0 0.0
    %376 = vmatpush1.msra.mxu0 %v370
    %377 = vmatprep.subr.mxu0 0.0
    %378 = vmatpush1.msra.mxu0 0.0
    %379 = vmatprep.subr.mxu0 0.0
    %380 = vmatpush1.msra.mxu0 0.0
    %381 = vmatprep.subr.mxu0 0.0
    %382 = vmatpush1.msra.mxu0 0.0
    %383 = vmatprep.subr.mxu0 0.0
    %384 = vmatpush1.msra.mxu0 0.0
    %385 = vmatprep.subr.mxu0 0.0
    %386 = vmatpush1.msra.mxu0 0.0
    %387 = vmatprep.subr.mxu0 0.0
    %388 = vmatpush1.msra.mxu0 0.0
    %389 = vmatprep.subr.mxu0 0.0
    %390 = vmatpush1.msra.mxu0 0.0
    %391 = vmatprep.subr.mxu0 0.0
    %392 = vmatpush1.msra.mxu0 0.0
    %393 = vmatprep.subr.mxu0 0.0
    %394 = vmatpush1.msra.mxu0 0.0
    %395 = vmatprep.subr.mxu0 0.0
    %396 = vmatpush1.msra.mxu0 0.0
    %397 = vmatprep.subr.mxu0 0.0
    %398 = vmatpush1.msra.mxu0 0.0
    %399 = vmatprep.subr.mxu0 0.0
    %400 = vmatpush1.msra.mxu0 0.0
    %401 = vmatprep.subr.mxu0 0.0
    %402 = vmatpush1.msra.mxu0 0.0
    %403 = vmatprep.subr.mxu0 0.0
    %404 = vmatpush1.msra.mxu0 0.0
    %405 = vmatprep.subr.mxu0 0.0
    %406 = vmatpush1.msra.mxu0 0.0
    %407 = vmatprep.subr.mxu0 0.0
    %408 = vmatpush1.msra.mxu0 0.0
    %409 = vmatprep.subr.mxu0 0.0
    %410 = vmatpush1.msra.mxu0 0.0
    %411 = vmatprep.subr.mxu0 0.0
    %412 = vmatpush1.msra.mxu0 0.0
    %413 = vmatprep.subr.mxu0 0.0
    %414 = vmatpush1.msra.mxu0 0.0
    %415 = vmatprep.subr.mxu0 0.0
    %416 = vmatpush1.msra.mxu0 0.0
    %417 = vmatprep.subr.mxu0 0.0
    %418 = vmatpush1.msra.mxu0 0.0
    %419 = vmatprep.subr.mxu0 0.0
    %420 = vmatpush1.msra.mxu0 0.0
    %421 = vmatprep.subr.mxu0 0.0
    %422 = vmatpush1.msra.mxu0 0.0
    %423 = vmatprep.subr.mxu0 0.0
    %424 = vmatpush1.msra.mxu0 0.0
    %425 = vmatprep.subr.mxu0 0.0
    %426 = vmatpush1.msra.mxu0 0.0
    %427 = vmatprep.subr.mxu0 0.0
    %428 = vmatpush1.msra.mxu0 0.0
    %429 = vmatprep.subr.mxu0 0.0
    %430 = vmatpush1.msra.mxu0 0.0
    %431 = vmatprep.subr.mxu0 0.0
    %432 = vmatpush1.msra.mxu0 0.0
    %433 = vmatprep.subr.mxu0 0.0
    %434 = vmatpush1.msra.mxu0 0.0
    %435 = vmatprep.subr.mxu0 0.0
    %436 = vmatpush1.msra.mxu0 0.0
    %437 = vmatprep.subr.mxu0 0.0
    %438 = vmatpush1.msra.mxu0 0.0
    %439 = vmatprep.mubr.f32.mxu0 0.0
    %440 = vmatmul.mubr.f32.gmra.mrb[0].mxu0 %v373
    %v441 = vpop.f32.mrb[0].mxu0
    %v442 = vadd.f32 0.0, %v441
    %v443 = vpop.f32.mrb[0].mxu0
    %444 = vdwg.mxu0
    %v446 = vsel %vm116, %v442, 0
    %448 = vmatprep.subr.mxu0 0.0
    %449 = vmatpush1.msra.mxu0 %v104
    %450 = vmatprep.subr.mxu0 0.0
    %451 = vmatpush1.msra.mxu0 0.0
    %452 = vmatprep.subr.mxu0 0.0
    %453 = vmatpush1.msra.mxu0 0.0
    %454 = vmatprep.subr.mxu0 0.0
    %455 = vmatpush1.msra.mxu0 0.0
    %456 = vmatprep.subr.mxu0 0.0
    %457 = vmatpush1.msra.mxu0 0.0
    %458 = vmatprep.subr.mxu0 0.0
    %459 = vmatpush1.msra.mxu0 0.0
    %460 = vmatprep.subr.mxu0 0.0
    %461 = vmatpush1.msra.mxu0 0.0
    %462 = vmatprep.subr.mxu0 0.0
    %463 = vmatpush1.msra.mxu0 0.0
    %464 = vmatprep.subr.mxu0 0.0
    %465 = vmatpush1.msra.mxu0 0.0
    %466 = vmatprep.subr.mxu0 0.0
    %467 = vmatpush1.msra.mxu0 0.0
    %468 = vmatprep.subr.mxu0 0.0
    %469 = vmatpush1.msra.mxu0 0.0
    %470 = vmatprep.subr.mxu0 0.0
    %471 = vmatpush1.msra.mxu0 0.0
    %472 = vmatprep.subr.mxu0 0.0
    %473 = vmatpush1.msra.mxu0 0.0
    %474 = vmatprep.subr.mxu0 0.0
    %475 = vmatpush1.msra.mxu0 0.0
    %476 = vmatprep.subr.mxu0 0.0
    %477 = vmatpush1.msra.mxu0 0.0
    %478 = vmatprep.subr.mxu0 0.0
    %479 = vmatpush1.msra.mxu0 0.0
    %480 = vmatprep.subr.mxu0 0.0
    %481 = vmatpush1.msra.mxu0 0.0
    %482 = vmatprep.subr.mxu0 0.0
    %483 = vmatpush1.msra.mxu0 0.0
    %484 = vmatprep.subr.mxu0 0.0
    %485 = vmatpush1.msra.mxu0 0.0
    %486 = vmatprep.subr.mxu0 0.0
    %487 = vmatpush1.msra.mxu0 0.0
    %488 = vmatprep.subr.mxu0 0.0
    %489 = vmatpush1.msra.mxu0 0.0
    %490 = vmatprep.subr.mxu0 0.0
    %491 = vmatpush1.msra.mxu0 0.0
    %492 = vmatprep.subr.mxu0 0.0
    %493 = vmatpush1.msra.mxu0 0.0
    %494 = vmatprep.subr.mxu0 0.0
    %495 = vmatpush1.msra.mxu0 0.0
    %496 = vmatprep.subr.mxu0 0.0
    %497 = vmatpush1.msra.mxu0 0.0
    %498 = vmatprep.subr.mxu0 0.0
    %499 = vmatpush1.msra.mxu0 0.0
    %500 = vmatprep.subr.mxu0 0.0
    %501 = vmatpush1.msra.mxu0 0.0
    %502 = vmatprep.subr.mxu0 0.0
    %503 = vmatpush1.msra.mxu0 0.0
    %504 = vmatprep.subr.mxu0 0.0
    %505 = vmatpush1.msra.mxu0 0.0
    %506 = vmatprep.subr.mxu0 0.0
    %507 = vmatpush1.msra.mxu0 0.0
    %508 = vmatprep.subr.mxu0 0.0
    %509 = vmatpush1.msra.mxu0 0.0
    %510 = vmatprep.subr.mxu0 0.0
    %511 = vmatpush1.msra.mxu0 0.0
    %512 = vmatprep.mubr.f32.mxu0 0.0
    %513 = vmatmul.mubr.f32.gmra.mrb[0].mxu0 %v446
    %v514 = vpop.f32.mrb[0].mxu0
    %v515 = vadd.f32 0.0, %v514
    %v516 = vpop.f32.mrb[0].mxu0
    %517 = vdwg.mxu0
    %v519 = vsel %vm116, %v276, 0
    %521 = vmatprep.subr.mxu0 0.0
    %522 = vmatpush1.msra.mxu0 %v103
    %523 = vmatprep.subr.mxu0 0.0
    %524 = vmatpush1.msra.mxu0 0.0
    %525 = vmatprep.subr.mxu0 0.0
    %526 = vmatpush1.msra.mxu0 0.0
    %527 = vmatprep.subr.mxu0 0.0
    %528 = vmatpush1.msra.mxu0 0.0
    %529 = vmatprep.subr.mxu0 0.0
    %530 = vmatpush1.msra.mxu0 0.0
    %531 = vmatprep.subr.mxu0 0.0
    %532 = vmatpush1.msra.mxu0 0.0
    %533 = vmatprep.subr.mxu0 0.0
    %534 = vmatpush1.msra.mxu0 0.0
    %535 = vmatprep.subr.mxu0 0.0
    %536 = vmatpush1.msra.mxu0 0.0
    %537 = vmatprep.subr.mxu0 0.0
    %538 = vmatpush1.msra.mxu0 0.0
    %539 = vmatprep.subr.mxu0 0.0
    %540 = vmatpush1.msra.mxu0 0.0
    %541 = vmatprep.subr.mxu0 0.0
    %542 = vmatpush1.msra.mxu0 0.0
    %543 = vmatprep.subr.mxu0 0.0
    %544 = vmatpush1.msra.mxu0 0.0
    %545 = vmatprep.subr.mxu0 0.0
    %546 = vmatpush1.msra.mxu0 0.0
    %547 = vmatprep.subr.mxu0 0.0
    %548 = vmatpush1.msra.mxu0 0.0
    %549 = vmatprep.subr.mxu0 0.0
    %550 = vmatpush1.msra.mxu0 0.0
    %551 = vmatprep.subr.mxu0 0.0
    %552 = vmatpush1.msra.mxu0 0.0
    %553 = vmatprep.subr.mxu0 0.0
    %554 = vmatpush1.msra.mxu0 0.0
    %555 = vmatprep.subr.mxu0 0.0
    %556 = vmatpush1.msra.mxu0 0.0
    %557 = vmatprep.subr.mxu0 0.0
    %558 = vmatpush1.msra.mxu0 0.0
    %559 = vmatprep.subr.mxu0 0.0
    %560 = vmatpush1.msra.mxu0 0.0
    %561 = vmatprep.subr.mxu0 0.0
    %562 = vmatpush1.msra.mxu0 0.0
    %563 = vmatprep.subr.mxu0 0.0
    %564 = vmatpush1.msra.mxu0 0.0
    %565 = vmatprep.subr.mxu0 0.0
    %566 = vmatpush1.msra.mxu0 0.0
    %567 = vmatprep.subr.mxu0 0.0
    %568 = vmatpush1.msra.mxu0 0.0
    %569 = vmatprep.subr.mxu0 0.0
    %570 = vmatpush1.msra.mxu0 0.0
    %571 = vmatprep.subr.mxu0 0.0
    %572 = vmatpush1.msra.mxu0 0.0
    %573 = vmatprep.subr.mxu0 0.0
    %574 = vmatpush1.msra.mxu0 0.0
    %575 = vmatprep.subr.mxu0 0.0
    %576 = vmatpush1.msra.mxu0 0.0
    %577 = vmatprep.subr.mxu0 0.0
    %578 = vmatpush1.msra.mxu0 0.0
    %579 = vmatprep.subr.mxu0 0.0
    %580 = vmatpush1.msra.mxu0 0.0
    %581 = vmatprep.subr.mxu0 0.0
    %582 = vmatpush1.msra.mxu0 0.0
    %583 = vmatprep.subr.mxu0 0.0
    %584 = vmatpush1.msra.mxu0 0.0
    %585 = vmatprep.mubr.f32.mxu0 0.0
    %586 = vmatmul.mubr.f32.gmra.mrb[0].mxu0 %v519
    %v587 = vpop.f32.mrb[0].mxu0
    %v588 = vadd.f32 %v515, %v587
    %v589 = vpop.f32.mrb[0].mxu0
    %590 = vdwg.mxu0
    %591 = vrot.lane.b32.xlu0 %v95, 80
    %v592 = vpop.permute.xlu0 %591
    %593 = vrot.lane.b32.xlu0 %v95, 72
    %v594 = vpop.permute.xlu0 %593
    %v595 = vsel %vm116, %v592, 0
    %v597 = vsel %vm116, %v594, 0
    %599 = vmatprep.subr.mxu0 0.0
    %600 = vmatpush1.xpose.msra.mxu0 %v597
    %601 = vmatprep.subr.mxu0 0.0
    %602 = vmatpush1.xpose.msra.mxu0 0.0
    %603 = vmatprep.subr.mxu0 0.0
    %604 = vmatpush1.xpose.msra.mxu0 0.0
    %605 = vmatprep.subr.mxu0 0.0
    %606 = vmatpush1.xpose.msra.mxu0 0.0
    %607 = vmatprep.subr.mxu0 0.0
    %608 = vmatpush1.xpose.msra.mxu0 0.0
    %609 = vmatprep.subr.mxu0 0.0
    %610 = vmatpush1.xpose.msra.mxu0 0.0
    %611 = vmatprep.subr.mxu0 0.0
    %612 = vmatpush1.xpose.msra.mxu0 0.0
    %613 = vmatprep.subr.mxu0 0.0
    %614 = vmatpush1.xpose.msra.mxu0 0.0
    %615 = vmatprep.subr.mxu0 0.0
    %616 = vmatpush1.xpose.msra.mxu0 0.0
    %617 = vmatprep.subr.mxu0 0.0
    %618 = vmatpush1.xpose.msra.mxu0 0.0
    %619 = vmatprep.subr.mxu0 0.0
    %620 = vmatpush1.xpose.msra.mxu0 0.0
    %621 = vmatprep.subr.mxu0 0.0
    %622 = vmatpush1.xpose.msra.mxu0 0.0
    %623 = vmatprep.subr.mxu0 0.0
    %624 = vmatpush1.xpose.msra.mxu0 0.0
    %625 = vmatprep.subr.mxu0 0.0
    %626 = vmatpush1.xpose.msra.mxu0 0.0
    %627 = vmatprep.subr.mxu0 0.0
    %628 = vmatpush1.xpose.msra.mxu0 0.0
    %629 = vmatprep.subr.mxu0 0.0
    %630 = vmatpush1.xpose.msra.mxu0 0.0
    %631 = vmatprep.subr.mxu0 0.0
    %632 = vmatpush1.xpose.msra.mxu0 0.0
    %633 = vmatprep.subr.mxu0 0.0
    %634 = vmatpush1.xpose.msra.mxu0 0.0
    %635 = vmatprep.subr.mxu0 0.0
    %636 = vmatpush1.xpose.msra.mxu0 0.0
    %637 = vmatprep.subr.mxu0 0.0
    %638 = vmatpush1.xpose.msra.mxu0 0.0
    %639 = vmatprep.subr.mxu0 0.0
    %640 = vmatpush1.xpose.msra.mxu0 0.0
    %641 = vmatprep.subr.mxu0 0.0
    %642 = vmatpush1.xpose.msra.mxu0 0.0
    %643 = vmatprep.subr.mxu0 0.0
    %644 = vmatpush1.xpose.msra.mxu0 0.0
    %645 = vmatprep.subr.mxu0 0.0
    %646 = vmatpush1.xpose.msra.mxu0 0.0
    %647 = vmatprep.subr.mxu0 0.0
    %648 = vmatpush1.xpose.msra.mxu0 0.0
    %649 = vmatprep.subr.mxu0 0.0
    %650 = vmatpush1.xpose.msra.mxu0 0.0
    %651 = vmatprep.subr.mxu0 0.0
    %652 = vmatpush1.xpose.msra.mxu0 0.0
    %653 = vmatprep.subr.mxu0 0.0
    %654 = vmatpush1.xpose.msra.mxu0 0.0
    %655 = vmatprep.subr.mxu0 0.0
    %656 = vmatpush1.xpose.msra.mxu0 0.0
    %657 = vmatprep.subr.mxu0 0.0
    %658 = vmatpush1.xpose.msra.mxu0 0.0
    %659 = vmatprep.subr.mxu0 0.0
    %660 = vmatpush1.xpose.msra.mxu0 0.0
    %661 = vmatprep.subr.mxu0 0.0
    %662 = vmatpush1.xpose.msra.mxu0 0.0
    %663 = vmatprep.mubr.f32.mxu0 0.0
    %664 = vmatmul.mubr.f32.gmra.mrb[0].mxu0 %v595
    %v665 = vpop.f32.mrb[0].mxu0
    %v666 = vadd.f32 0.0, %v665
    %v667 = vpop.f32.mrb[0].mxu0
    %668 = vdwg.mxu0
    %v669 = vsel %vm112, -1e+30, %v666
    %v670 = vsel %vm116, %v669, -inf
    %671 = vmax.xlane.f32.xlu0 %v670
    %v672 = vpop.xlane.xlu0 %671
    %v673 = vsub.f32 %v669, %v672
    %v674 = vmul.f32 %v673, 1.442695
    %v675 = vpow.pop %v674
    %v676 = vsel %vm116, %v675, 0.0
    %677 = vadd.xlane.f32.xlu0 %v676
    %v678 = vpop.xlane.xlu0 %677
    %v679 = vrcp.pop %v678
    %v680 = vmul.f32 %v675, %v679
    %681 = vrot.lane.b32.xlu0 %v95, 64
    %v682 = vpop.permute.xlu0 %681
    %v685 = vsel %vm116, %v680, 0
    %687 = vmatprep.subr.mxu0 0.0
    %688 = vmatpush1.msra.mxu0 %v682
    %689 = vmatprep.subr.mxu0 0.0
    %690 = vmatpush1.msra.mxu0 0.0
    %691 = vmatprep.subr.mxu0 0.0
    %692 = vmatpush1.msra.mxu0 0.0
    %693 = vmatprep.subr.mxu0 0.0
    %694 = vmatpush1.msra.mxu0 0.0
    %695 = vmatprep.subr.mxu0 0.0
    %696 = vmatpush1.msra.mxu0 0.0
    %697 = vmatprep.subr.mxu0 0.0
    %698 = vmatpush1.msra.mxu0 0.0
    %699 = vmatprep.subr.mxu0 0.0
    %700 = vmatpush1.msra.mxu0 0.0
    %701 = vmatprep.subr.mxu0 0.0
    %702 = vmatpush1.msra.mxu0 0.0
    %703 = vmatprep.subr.mxu0 0.0
    %704 = vmatpush1.msra.mxu0 0.0
    %705 = vmatprep.subr.mxu0 0.0
    %706 = vmatpush1.msra.mxu0 0.0
    %707 = vmatprep.subr.mxu0 0.0
    %708 = vmatpush1.msra.mxu0 0.0
    %709 = vmatprep.subr.mxu0 0.0
    %710 = vmatpush1.msra.mxu0 0.0
    %711 = vmatprep.subr.mxu0 0.0
    %712 = vmatpush1.msra.mxu0 0.0
    %713 = vmatprep.subr.mxu0 0.0
    %714 = vmatpush1.msra.mxu0 0.0
    %715 = vmatprep.subr.mxu0 0.0
    %716 = vmatpush1.msra.mxu0 0.0
    %717 = vmatprep.subr.mxu0 0.0
    %718 = vmatpush1.msra.mxu0 0.0
    %719 = vmatprep.subr.mxu0 0.0
    %720 = vmatpush1.msra.mxu0 0.0
    %721 = vmatprep.subr.mxu0 0.0
    %722 = vmatpush1.msra.mxu0 0.0
    %723 = vmatprep.subr.mxu0 0.0
    %724 = vmatpush1.msra.mxu0 0.0
    %725 = vmatprep.subr.mxu0 0.0
    %726 = vmatpush1.msra.mxu0 0.0
    %727 = vmatprep.subr.mxu0 0.0
    %728 = vmatpush1.msra.mxu0 0.0
    %729 = vmatprep.subr.mxu0 0.0
    %730 = vmatpush1.msra.mxu0 0.0
    %731 = vmatprep.subr.mxu0 0.0
    %732 = vmatpush1.msra.mxu0 0.0
    %733 = vmatprep.subr.mxu0 0.0
    %734 = vmatpush1.msra.mxu0 0.0
    %735 = vmatprep.subr.mxu0 0.0
    %736 = vmatpush1.msra.mxu0 0.0
    %737 = vmatprep.subr.mxu0 0.0
    %738 = vmatpush1.msra.mxu0 0.0
    %739 = vmatprep.subr.mxu0 0.0
    %740 = vmatpush1.msra.mxu0 0.0
    %741 = vmatprep.subr.mxu0 0.0
    %742 = vmatpush1.msra.mxu0 0.0
    %743 = vmatprep.subr.mxu0 0.0
    %744 = vmatpush1.msra.mxu0 0.0
    %745 = vmatprep.subr.mxu0 0.0
    %746 = vmatpush1.msra.mxu0 0.0
    %747 = vmatprep.subr.mxu0 0.0
    %748 = vmatpush1.msra.mxu0 0.0
    %749 = vmatprep.subr.mxu0 0.0
    %750 = vmatpush1.msra.mxu0 0.0
    %751 = vmatprep.mubr.f32.mxu0 0.0
    %752 = vmatmul.mubr.f32.gmra.mrb[0].mxu0 %v685
    %v753 = vpop.f32.mrb[0].mxu0
    %v754 = vadd.f32 0.0, %v753
    %v755 = vpop.f32.mrb[0].mxu0
    %756 = vdwg.mxu0
    %v758 = vsel %vm116, %v754, 0
    %760 = vmatprep.subr.mxu0 0.0
    %761 = vmatpush1.msra.mxu0 %v105
    %762 = vmatprep.subr.mxu0 0.0
    %763 = vmatpush1.msra.mxu0 0.0
    %764 = vmatprep.subr.mxu0 0.0
    %765 = vmatpush1.msra.mxu0 0.0
    %766 = vmatprep.subr.mxu0 0.0
    %767 = vmatpush1.msra.mxu0 0.0
    %768 = vmatprep.subr.mxu0 0.0
    %769 = vmatpush1.msra.mxu0 0.0
    %770 = vmatprep.subr.mxu0 0.0
    %771 = vmatpush1.msra.mxu0 0.0
    %772 = vmatprep.subr.mxu0 0.0
    %773 = vmatpush1.msra.mxu0 0.0
    %774 = vmatprep.subr.mxu0 0.0
    %775 = vmatpush1.msra.mxu0 0.0
    %776 = vmatprep.subr.mxu0 0.0
    %777 = vmatpush1.msra.mxu0 0.0
    %778 = vmatprep.subr.mxu0 0.0
    %779 = vmatpush1.msra.mxu0 0.0
    %780 = vmatprep.subr.mxu0 0.0
    %781 = vmatpush1.msra.mxu0 0.0
    %782 = vmatprep.subr.mxu0 0.0
    %783 = vmatpush1.msra.mxu0 0.0
    %784 = vmatprep.subr.mxu0 0.0
    %785 = vmatpush1.msra.mxu0 0.0
    %786 = vmatprep.subr.mxu0 0.0
    %787 = vmatpush1.msra.mxu0 0.0
    %788 = vmatprep.subr.mxu0 0.0
    %789 = vmatpush1.msra.mxu0 0.0
    %790 = vmatprep.subr.mxu0 0.0
    %791 = vmatpush1.msra.mxu0 0.0
    %792 = vmatprep.subr.mxu0 0.0
    %793 = vmatpush1.msra.mxu0 0.0
    %794 = vmatprep.subr.mxu0 0.0
    %795 = vmatpush1.msra.mxu0 0.0
    %796 = vmatprep.subr.mxu0 0.0
    %797 = vmatpush1.msra.mxu0 0.0
    %798 = vmatprep.subr.mxu0 0.0
    %799 = vmatpush1.msra.mxu0 0.0
    %800 = vmatprep.subr.mxu0 0.0
    %801 = vmatpush1.msra.mxu0 0.0
    %802 = vmatprep.subr.mxu0 0.0
    %803 = vmatpush1.msra.mxu0 0.0
    %804 = vmatprep.subr.mxu0 0.0
    %805 = vmatpush1.msra.mxu0 0.0
    %806 = vmatprep.subr.mxu0 0.0
    %807 = vmatpush1.msra.mxu0 0.0
    %808 = vmatprep.subr.mxu0 0.0
    %809 = vmatpush1.msra.mxu0 0.0
    %810 = vmatprep.subr.mxu0 0.0
    %811 = vmatpush1.msra.mxu0 0.0
    %812 = vmatprep.subr.mxu0 0.0
    %813 = vmatpush1.msra.mxu0 0.0
    %814 = vmatprep.subr.mxu0 0.0
    %815 = vmatpush1.msra.mxu0 0.0
    %816 = vmatprep.subr.mxu0 0.0
    %817 = vmatpush1.msra.mxu0 0.0
    %818 = vmatprep.subr.mxu0 0.0
    %819 = vmatpush1.msra.mxu0 0.0
    %820 = vmatprep.subr.mxu0 0.0
    %821 = vmatpush1.msra.mxu0 0.0
    %822 = vmatprep.subr.mxu0 0.0
    %823 = vmatpush1.msra.mxu0 0.0
    %824 = vmatprep.mubr.f32.mxu0 0.0
    %825 = vmatmul.mubr.f32.gmra.mrb[0].mxu0 %v758
    %v826 = vpop.f32.mrb[0].mxu0
    %v827 = vadd.f32 0.0, %v826
    %v828 = vpop.f32.mrb[0].mxu0
    %829 = vdwg.mxu0
    %v830 = vadd.f32 %v588, %v827
    %831 = vrot.lane.b32.xlu0 %v95, 56
    %v832 = vpop.permute.xlu0 %831
    %833 = vrot.lane.b32.xlu0 %v95, 48
    %v834 = vpop.permute.xlu0 %833
    %v835 = vsel %vm116, %v832, 0
    %v837 = vsel %vm116, %v834, 0
    %839 = vmatprep.subr.mxu0 0.0
    %840 = vmatpush1.xpose.msra.mxu0 %v837
    %841 = vmatprep.subr.mxu0 0.0
    %842 = vmatpush1.xpose.msra.mxu0 0.0
    %843 = vmatprep.subr.mxu0 0.0
    %844 = vmatpush1.xpose.msra.mxu0 0.0
    %845 = vmatprep.subr.mxu0 0.0
    %846 = vmatpush1.xpose.msra.mxu0 0.0
    %847 = vmatprep.subr.mxu0 0.0
    %848 = vmatpush1.xpose.msra.mxu0 0.0
    %849 = vmatprep.subr.mxu0 0.0
    %850 = vmatpush1.xpose.msra.mxu0 0.0
    %851 = vmatprep.subr.mxu0 0.0
    %852 = vmatpush1.xpose.msra.mxu0 0.0
    %853 = vmatprep.subr.mxu0 0.0
    %854 = vmatpush1.xpose.msra.mxu0 0.0
    %855 = vmatprep.subr.mxu0 0.0
    %856 = vmatpush1.xpose.msra.mxu0 0.0
    %857 = vmatprep.subr.mxu0 0.0
    %858 = vmatpush1.xpose.msra.mxu0 0.0
    %859 = vmatprep.subr.mxu0 0.0
    %860 = vmatpush1.xpose.msra.mxu0 0.0
    %861 = vmatprep.subr.mxu0 0.0
    %862 = vmatpush1.xpose.msra.mxu0 0.0
    %863 = vmatprep.subr.mxu0 0.0
    %864 = vmatpush1.xpose.msra.mxu0 0.0
    %865 = vmatprep.subr.mxu0 0.0
    %866 = vmatpush1.xpose.msra.mxu0 0.0
    %867 = vmatprep.subr.mxu0 0.0
    %868 = vmatpush1.xpose.msra.mxu0 0.0
    %869 = vmatprep.subr.mxu0 0.0
    %870 = vmatpush1.xpose.msra.mxu0 0.0
    %871 = vmatprep.subr.mxu0 0.0
    %872 = vmatpush1.xpose.msra.mxu0 0.0
    %873 = vmatprep.subr.mxu0 0.0
    %874 = vmatpush1.xpose.msra.mxu0 0.0
    %875 = vmatprep.subr.mxu0 0.0
    %876 = vmatpush1.xpose.msra.mxu0 0.0
    %877 = vmatprep.subr.mxu0 0.0
    %878 = vmatpush1.xpose.msra.mxu0 0.0
    %879 = vmatprep.subr.mxu0 0.0
    %880 = vmatpush1.xpose.msra.mxu0 0.0
    %881 = vmatprep.subr.mxu0 0.0
    %882 = vmatpush1.xpose.msra.mxu0 0.0
    %883 = vmatprep.subr.mxu0 0.0
    %884 = vmatpush1.xpose.msra.mxu0 0.0
    %885 = vmatprep.subr.mxu0 0.0
    %886 = vmatpush1.xpose.msra.mxu0 0.0
    %887 = vmatprep.subr.mxu0 0.0
    %888 = vmatpush1.xpose.msra.mxu0 0.0
    %889 = vmatprep.subr.mxu0 0.0
    %890 = vmatpush1.xpose.msra.mxu0 0.0
    %891 = vmatprep.subr.mxu0 0.0
    %892 = vmatpush1.xpose.msra.mxu0 0.0
    %893 = vmatprep.subr.mxu0 0.0
    %894 = vmatpush1.xpose.msra.mxu0 0.0
    %895 = vmatprep.subr.mxu0 0.0
    %896 = vmatpush1.xpose.msra.mxu0 0.0
    %897 = vmatprep.subr.mxu0 0.0
    %898 = vmatpush1.xpose.msra.mxu0 0.0
    %899 = vmatprep.subr.mxu0 0.0
    %900 = vmatpush1.xpose.msra.mxu0 0.0
    %901 = vmatprep.subr.mxu0 0.0
    %902 = vmatpush1.xpose.msra.mxu0 0.0
    %903 = vmatprep.mubr.f32.mxu0 0.0
    %904 = vmatmul.mubr.f32.gmra.mrb[0].mxu0 %v835
    %v905 = vpop.f32.mrb[0].mxu0
    %v906 = vadd.f32 0.0, %v905
    %v907 = vpop.f32.mrb[0].mxu0
    %908 = vdwg.mxu0
    %v909 = vsel %vm112, -1e+30, %v906
    %v910 = vsel %vm116, %v909, -inf
    %911 = vmax.xlane.f32.xlu0 %v910
    %v912 = vpop.xlane.xlu0 %911
    %v913 = vsub.f32 %v909, %v912
    %v914 = vmul.f32 %v913, 1.442695
    %v915 = vpow.pop %v914
    %v916 = vsel %vm116, %v915, 0.0
    %917 = vadd.xlane.f32.xlu0 %v916
    %v918 = vpop.xlane.xlu0 %917
    %v919 = vrcp.pop %v918
    %v920 = vmul.f32 %v915, %v919
    %921 = vrot.lane.b32.xlu0 %v95, 40
    %v922 = vpop.permute.xlu0 %921
    %v925 = vsel %vm116, %v920, 0
    %927 = vmatprep.subr.mxu0 0.0
    %928 = vmatpush1.msra.mxu0 %v922
    %929 = vmatprep.subr.mxu0 0.0
    %930 = vmatpush1.msra.mxu0 0.0
    %931 = vmatprep.subr.mxu0 0.0
    %932 = vmatpush1.msra.mxu0 0.0
    %933 = vmatprep.subr.mxu0 0.0
    %934 = vmatpush1.msra.mxu0 0.0
    %935 = vmatprep.subr.mxu0 0.0
    %936 = vmatpush1.msra.mxu0 0.0
    %937 = vmatprep.subr.mxu0 0.0
    %938 = vmatpush1.msra.mxu0 0.0
    %939 = vmatprep.subr.mxu0 0.0
    %940 = vmatpush1.msra.mxu0 0.0
    %941 = vmatprep.subr.mxu0 0.0
    %942 = vmatpush1.msra.mxu0 0.0
    %943 = vmatprep.subr.mxu0 0.0
    %944 = vmatpush1.msra.mxu0 0.0
    %945 = vmatprep.subr.mxu0 0.0
    %946 = vmatpush1.msra.mxu0 0.0
    %947 = vmatprep.subr.mxu0 0.0
    %948 = vmatpush1.msra.mxu0 0.0
    %949 = vmatprep.subr.mxu0 0.0
    %950 = vmatpush1.msra.mxu0 0.0
    %951 = vmatprep.subr.mxu0 0.0
    %952 = vmatpush1.msra.mxu0 0.0
    %953 = vmatprep.subr.mxu0 0.0
    %954 = vmatpush1.msra.mxu0 0.0
    %955 = vmatprep.subr.mxu0 0.0
    %956 = vmatpush1.msra.mxu0 0.0
    %957 = vmatprep.subr.mxu0 0.0
    %958 = vmatpush1.msra.mxu0 0.0
    %959 = vmatprep.subr.mxu0 0.0
    %960 = vmatpush1.msra.mxu0 0.0
    %961 = vmatprep.subr.mxu0 0.0
    %962 = vmatpush1.msra.mxu0 0.0
    %963 = vmatprep.subr.mxu0 0.0
    %964 = vmatpush1.msra.mxu0 0.0
    %965 = vmatprep.subr.mxu0 0.0
    %966 = vmatpush1.msra.mxu0 0.0
    %967 = vmatprep.subr.mxu0 0.0
    %968 = vmatpush1.msra.mxu0 0.0
    %969 = vmatprep.subr.mxu0 0.0
    %970 = vmatpush1.msra.mxu0 0.0
    %971 = vmatprep.subr.mxu0 0.0
    %972 = vmatpush1.msra.mxu0 0.0
    %973 = vmatprep.subr.mxu0 0.0
    %974 = vmatpush1.msra.mxu0 0.0
    %975 = vmatprep.subr.mxu0 0.0
    %976 = vmatpush1.msra.mxu0 0.0
    %977 = vmatprep.subr.mxu0 0.0
    %978 = vmatpush1.msra.mxu0 0.0
    %979 = vmatprep.subr.mxu0 0.0
    %980 = vmatpush1.msra.mxu0 0.0
    %981 = vmatprep.subr.mxu0 0.0
    %982 = vmatpush1.msra.mxu0 0.0
    %983 = vmatprep.subr.mxu0 0.0
    %984 = vmatpush1.msra.mxu0 0.0
    %985 = vmatprep.subr.mxu0 0.0
    %986 = vmatpush1.msra.mxu0 0.0
    %987 = vmatprep.subr.mxu0 0.0
    %988 = vmatpush1.msra.mxu0 0.0
    %989 = vmatprep.subr.mxu0 0.0
    %990 = vmatpush1.msra.mxu0 0.0
    %991 = vmatprep.mubr.f32.mxu0 0.0
    %992 = vmatmul.mubr.f32.gmra.mrb[0].mxu0 %v925
    %v993 = vpop.f32.mrb[0].mxu0
    %v994 = vadd.f32 0.0, %v993
    %v995 = vpop.f32.mrb[0].mxu0
    %996 = vdwg.mxu0
    %v998 = vsel %vm116, %v994, 0
    %1000 = vmatprep.subr.mxu0 0.0
    %1001 = vmatpush1.msra.mxu0 %v106
    %1002 = vmatprep.subr.mxu0 0.0
    %1003 = vmatpush1.msra.mxu0 0.0
    %1004 = vmatprep.subr.mxu0 0.0
    %1005 = vmatpush1.msra.mxu0 0.0
    %1006 = vmatprep.subr.mxu0 0.0
    %1007 = vmatpush1.msra.mxu0 0.0
    %1008 = vmatprep.subr.mxu0 0.0
    %1009 = vmatpush1.msra.mxu0 0.0
    %1010 = vmatprep.subr.mxu0 0.0
    %1011 = vmatpush1.msra.mxu0 0.0
    %1012 = vmatprep.subr.mxu0 0.0
    %1013 = vmatpush1.msra.mxu0 0.0
    %1014 = vmatprep.subr.mxu0 0.0
    %1015 = vmatpush1.msra.mxu0 0.0
    %1016 = vmatprep.subr.mxu0 0.0
    %1017 = vmatpush1.msra.mxu0 0.0
    %1018 = vmatprep.subr.mxu0 0.0
    %1019 = vmatpush1.msra.mxu0 0.0
    %1020 = vmatprep.subr.mxu0 0.0
    %1021 = vmatpush1.msra.mxu0 0.0
    %1022 = vmatprep.subr.mxu0 0.0
    %1023 = vmatpush1.msra.mxu0 0.0
    %1024 = vmatprep.subr.mxu0 0.0
    %1025 = vmatpush1.msra.mxu0 0.0
    %1026 = vmatprep.subr.mxu0 0.0
    %1027 = vmatpush1.msra.mxu0 0.0
    %1028 = vmatprep.subr.mxu0 0.0
    %1029 = vmatpush1.msra.mxu0 0.0
    %1030 = vmatprep.subr.mxu0 0.0
    %1031 = vmatpush1.msra.mxu0 0.0
    %1032 = vmatprep.subr.mxu0 0.0
    %1033 = vmatpush1.msra.mxu0 0.0
    %1034 = vmatprep.subr.mxu0 0.0
    %1035 = vmatpush1.msra.mxu0 0.0
    %1036 = vmatprep.subr.mxu0 0.0
    %1037 = vmatpush1.msra.mxu0 0.0
    %1038 = vmatprep.subr.mxu0 0.0
    %1039 = vmatpush1.msra.mxu0 0.0
    %1040 = vmatprep.subr.mxu0 0.0
    %1041 = vmatpush1.msra.mxu0 0.0
    %1042 = vmatprep.subr.mxu0 0.0
    %1043 = vmatpush1.msra.mxu0 0.0
    %1044 = vmatprep.subr.mxu0 0.0
    %1045 = vmatpush1.msra.mxu0 0.0
    %1046 = vmatprep.subr.mxu0 0.0
    %1047 = vmatpush1.msra.mxu0 0.0
    %1048 = vmatprep.subr.mxu0 0.0
    %1049 = vmatpush1.msra.mxu0 0.0
    %1050 = vmatprep.subr.mxu0 0.0
    %1051 = vmatpush1.msra.mxu0 0.0
    %1052 = vmatprep.subr.mxu0 0.0
    %1053 = vmatpush1.msra.mxu0 0.0
    %1054 = vmatprep.subr.mxu0 0.0
    %1055 = vmatpush1.msra.mxu0 0.0
    %1056 = vmatprep.subr.mxu0 0.0
    %1057 = vmatpush1.msra.mxu0 0.0
    %1058 = vmatprep.subr.mxu0 0.0
    %1059 = vmatpush1.msra.mxu0 0.0
    %1060 = vmatprep.subr.mxu0 0.0
    %1061 = vmatpush1.msra.mxu0 0.0
    %1062 = vmatprep.subr.mxu0 0.0
    %1063 = vmatpush1.msra.mxu0 0.0
    %1064 = vmatprep.mubr.f32.mxu0 0.0
    %1065 = vmatmul.mubr.f32.gmra.mrb[0].mxu0 %v998
    %v1066 = vpop.f32.mrb[0].mxu0
    %v1067 = vadd.f32 0.0, %v1066
    %v1068 = vpop.f32.mrb[0].mxu0
    %1069 = vdwg.mxu0
    %v1070 = vadd.f32 %v830, %v1067
    %v1071 = vlaneseq
    %v1072 = vshrl.u32 %v1071, 7
    %v1073 = vsub.s32 0, %v1072
    %v1074 = vrot.slane %v107, %v1073
    %v1075 = vadd.f32 %v1070, %v1074
    %1076 = vst.msk [vmem:[#allocation2] sm:$0xff] %vm21, %v1075
    %1078 = vrot.lane.b32.xlu0 %v100, 120
    %v1079 = vpop.permute.xlu0 %1078
    %v1080 = vsel %vm116, %v100, 0
    %v1082 = vsel %vm116, %v1079, 0
    %1084 = vmatprep.subr.mxu0 0.0
    %1085 = vmatpush1.xpose.msra.mxu0 %v1082
    %1086 = vmatprep.subr.mxu0 0.0
    %1087 = vmatpush1.xpose.msra.mxu0 0.0
    %1088 = vmatprep.subr.mxu0 0.0
    %1089 = vmatpush1.xpose.msra.mxu0 0.0
    %1090 = vmatprep.subr.mxu0 0.0
    %1091 = vmatpush1.xpose.msra.mxu0 0.0
    %1092 = vmatprep.subr.mxu0 0.0
    %1093 = vmatpush1.xpose.msra.mxu0 0.0
    %1094 = vmatprep.subr.mxu0 0.0
    %1095 = vmatpush1.xpose.msra.mxu0 0.0
    %1096 = vmatprep.subr.mxu0 0.0
    %1097 = vmatpush1.xpose.msra.mxu0 0.0
    %1098 = vmatprep.subr.mxu0 0.0
    %1099 = vmatpush1.xpose.msra.mxu0 0.0
    %1100 = vmatprep.subr.mxu0 0.0
    %1101 = vmatpush1.xpose.msra.mxu0 0.0
    %1102 = vmatprep.subr.mxu0 0.0
    %1103 = vmatpush1.xpose.msra.mxu0 0.0
    %1104 = vmatprep.subr.mxu0 0.0
    %1105 = vmatpush1.xpose.msra.mxu0 0.0
    %1106 = vmatprep.subr.mxu0 0.0
    %1107 = vmatpush1.xpose.msra.mxu0 0.0
    %1108 = vmatprep.subr.mxu0 0.0
    %1109 = vmatpush1.xpose.msra.mxu0 0.0
    %1110 = vmatprep.subr.mxu0 0.0
    %1111 = vmatpush1.xpose.msra.mxu0 0.0
    %1112 = vmatprep.subr.mxu0 0.0
    %1113 = vmatpush1.xpose.msra.mxu0 0.0
    %1114 = vmatprep.subr.mxu0 0.0
    %1115 = vmatpush1.xpose.msra.mxu0 0.0
    %1116 = vmatprep.subr.mxu0 0.0
    %1117 = vmatpush1.xpose.msra.mxu0 0.0
    %1118 = vmatprep.subr.mxu0 0.0
    %1119 = vmatpush1.xpose.msra.mxu0 0.0
    %1120 = vmatprep.subr.mxu0 0.0
    %1121 = vmatpush1.xpose.msra.mxu0 0.0
    %1122 = vmatprep.subr.mxu0 0.0
    %1123 = vmatpush1.xpose.msra.mxu0 0.0
    %1124 = vmatprep.subr.mxu0 0.0
    %1125 = vmatpush1.xpose.msra.mxu0 0.0
    %1126 = vmatprep.subr.mxu0 0.0
    %1127 = vmatpush1.xpose.msra.mxu0 0.0
    %1128 = vmatprep.subr.mxu0 0.0
    %1129 = vmatpush1.xpose.msra.mxu0 0.0
    %1130 = vmatprep.subr.mxu0 0.0
    %1131 = vmatpush1.xpose.msra.mxu0 0.0
    %1132 = vmatprep.subr.mxu0 0.0
    %1133 = vmatpush1.xpose.msra.mxu0 0.0
    %1134 = vmatprep.subr.mxu0 0.0
    %1135 = vmatpush1.xpose.msra.mxu0 0.0
    %1136 = vmatprep.subr.mxu0 0.0
    %1137 = vmatpush1.xpose.msra.mxu0 0.0
    %1138 = vmatprep.subr.mxu0 0.0
    %1139 = vmatpush1.xpose.msra.mxu0 0.0
    %1140 = vmatprep.subr.mxu0 0.0
    %1141 = vmatpush1.xpose.msra.mxu0 0.0
    %1142 = vmatprep.subr.mxu0 0.0
    %1143 = vmatpush1.xpose.msra.mxu0 0.0
    %1144 = vmatprep.subr.mxu0 0.0
    %1145 = vmatpush1.xpose.msra.mxu0 0.0
    %1146 = vmatprep.subr.mxu0 0.0
    %1147 = vmatpush1.xpose.msra.mxu0 0.0
    %1148 = vmatprep.mubr.f32.mxu0 0.0
    %1149 = vmatmul.mubr.f32.gmra.mrb[0].mxu0 %v1080
    %v1150 = vpop.f32.mrb[0].mxu0
    %v1151 = vadd.f32 0.0, %v1150
    %v1152 = vpop.f32.mrb[0].mxu0
    %1153 = vdwg.mxu0
    %v1154 = vsel %vm112, -1e+30, %v1151
    %v1155 = vsel %vm116, %v1154, -inf
    %1156 = vmax.xlane.f32.xlu0 %v1155
    %v1157 = vpop.xlane.xlu0 %1156
    %v1158 = vsub.f32 %v1154, %v1157
    %v1159 = vmul.f32 %v1158, 1.442695
    %v1160 = vpow.pop %v1159
    %v1161 = vsel %vm116, %v1160, 0.0
    %1162 = vadd.xlane.f32.xlu0 %v1161
    %v1163 = vpop.xlane.xlu0 %1162
    %v1164 = vrcp.pop %v1163
    %v1165 = vmul.f32 %v1160, %v1164
    %1166 = vrot.lane.b32.xlu0 %v100, 112
    %v1167 = vpop.permute.xlu0 %1166
    %v1170 = vsel %vm116, %v1165, 0
    %1172 = vmatprep.subr.mxu0 0.0
    %1173 = vmatpush1.msra.mxu0 %v1167
    %1174 = vmatprep.subr.mxu0 0.0
    %1175 = vmatpush1.msra.mxu0 0.0
    %1176 = vmatprep.subr.mxu0 0.0
    %1177 = vmatpush1.msra.mxu0 0.0
    %1178 = vmatprep.subr.mxu0 0.0
    %1179 = vmatpush1.msra.mxu0 0.0
    %1180 = vmatprep.subr.mxu0 0.0
    %1181 = vmatpush1.msra.mxu0 0.0
    %1182 = vmatprep.subr.mxu0 0.0
    %1183 = vmatpush1.msra.mxu0 0.0
    %1184 = vmatprep.subr.mxu0 0.0
    %1185 = vmatpush1.msra.mxu0 0.0
    %1186 = vmatprep.subr.mxu0 0.0
    %1187 = vmatpush1.msra.mxu0 0.0
    %1188 = vmatprep.subr.mxu0 0.0
    %1189 = vmatpush1.msra.mxu0 0.0
    %1190 = vmatprep.subr.mxu0 0.0
    %1191 = vmatpush1.msra.mxu0 0.0
    %1192 = vmatprep.subr.mxu0 0.0
    %1193 = vmatpush1.msra.mxu0 0.0
    %1194 = vmatprep.subr.mxu0 0.0
    %1195 = vmatpush1.msra.mxu0 0.0
    %1196 = vmatprep.subr.mxu0 0.0
    %1197 = vmatpush1.msra.mxu0 0.0
    %1198 = vmatprep.subr.mxu0 0.0
    %1199 = vmatpush1.msra.mxu0 0.0
    %1200 = vmatprep.subr.mxu0 0.0
    %1201 = vmatpush1.msra.mxu0 0.0
    %1202 = vmatprep.subr.mxu0 0.0
    %1203 = vmatpush1.msra.mxu0 0.0
    %1204 = vmatprep.subr.mxu0 0.0
    %1205 = vmatpush1.msra.mxu0 0.0
    %1206 = vmatprep.subr.mxu0 0.0
    %1207 = vmatpush1.msra.mxu0 0.0
    %1208 = vmatprep.subr.mxu0 0.0
    %1209 = vmatpush1.msra.mxu0 0.0
    %1210 = vmatprep.subr.mxu0 0.0
    %1211 = vmatpush1.msra.mxu0 0.0
    %1212 = vmatprep.subr.mxu0 0.0
    %1213 = vmatpush1.msra.mxu0 0.0
    %1214 = vmatprep.subr.mxu0 0.0
    %1215 = vmatpush1.msra.mxu0 0.0
    %1216 = vmatprep.subr.mxu0 0.0
    %1217 = vmatpush1.msra.mxu0 0.0
    %1218 = vmatprep.subr.mxu0 0.0
    %1219 = vmatpush1.msra.mxu0 0.0
    %1220 = vmatprep.subr.mxu0 0.0
    %1221 = vmatpush1.msra.mxu0 0.0
    %1222 = vmatprep.subr.mxu0 0.0
    %1223 = vmatpush1.msra.mxu0 0.0
    %1224 = vmatprep.subr.mxu0 0.0
    %1225 = vmatpush1.msra.mxu0 0.0
    %1226 = vmatprep.subr.mxu0 0.0
    %1227 = vmatpush1.msra.mxu0 0.0
    %1228 = vmatprep.subr.mxu0 0.0
    %1229 = vmatpush1.msra.mxu0 0.0
    %1230 = vmatprep.subr.mxu0 0.0
    %1231 = vmatpush1.msra.mxu0 0.0
    %1232 = vmatprep.subr.mxu0 0.0
    %1233 = vmatpush1.msra.mxu0 0.0
    %1234 = vmatprep.subr.mxu0 0.0
    %1235 = vmatpush1.msra.mxu0 0.0
    %1236 = vmatprep.mubr.f32.mxu0 0.0
    %1237 = vmatmul.mubr.f32.gmra.mrb[0].mxu0 %v1170
    %v1238 = vpop.f32.mrb[0].mxu0
    %v1239 = vadd.f32 0.0, %v1238
    %v1240 = vpop.f32.mrb[0].mxu0
    %1241 = vdwg.mxu0
    %1242 = vrot.lane.b32.xlu0 %v100, 104
    %v1243 = vpop.permute.xlu0 %1242
    %1244 = vrot.lane.b32.xlu0 %v100, 96
    %v1245 = vpop.permute.xlu0 %1244
    %v1246 = vsel %vm116, %v1243, 0
    %v1248 = vsel %vm116, %v1245, 0
    %1250 = vmatprep.subr.mxu0 0.0
    %1251 = vmatpush1.xpose.msra.mxu0 %v1248
    %1252 = vmatprep.subr.mxu0 0.0
    %1253 = vmatpush1.xpose.msra.mxu0 0.0
    %1254 = vmatprep.subr.mxu0 0.0
    %1255 = vmatpush1.xpose.msra.mxu0 0.0
    %1256 = vmatprep.subr.mxu0 0.0
    %1257 = vmatpush1.xpose.msra.mxu0 0.0
    %1258 = vmatprep.subr.mxu0 0.0
    %1259 = vmatpush1.xpose.msra.mxu0 0.0
    %1260 = vmatprep.subr.mxu0 0.0
    %1261 = vmatpush1.xpose.msra.mxu0 0.0
    %1262 = vmatprep.subr.mxu0 0.0
    %1263 = vmatpush1.xpose.msra.mxu0 0.0
    %1264 = vmatprep.subr.mxu0 0.0
    %1265 = vmatpush1.xpose.msra.mxu0 0.0
    %1266 = vmatprep.subr.mxu0 0.0
    %1267 = vmatpush1.xpose.msra.mxu0 0.0
    %1268 = vmatprep.subr.mxu0 0.0
    %1269 = vmatpush1.xpose.msra.mxu0 0.0
    %1270 = vmatprep.subr.mxu0 0.0
    %1271 = vmatpush1.xpose.msra.mxu0 0.0
    %1272 = vmatprep.subr.mxu0 0.0
    %1273 = vmatpush1.xpose.msra.mxu0 0.0
    %1274 = vmatprep.subr.mxu0 0.0
    %1275 = vmatpush1.xpose.msra.mxu0 0.0
    %1276 = vmatprep.subr.mxu0 0.0
    %1277 = vmatpush1.xpose.msra.mxu0 0.0
    %1278 = vmatprep.subr.mxu0 0.0
    %1279 = vmatpush1.xpose.msra.mxu0 0.0
    %1280 = vmatprep.subr.mxu0 0.0
    %1281 = vmatpush1.xpose.msra.mxu0 0.0
    %1282 = vmatprep.subr.mxu0 0.0
    %1283 = vmatpush1.xpose.msra.mxu0 0.0
    %1284 = vmatprep.subr.mxu0 0.0
    %1285 = vmatpush1.xpose.msra.mxu0 0.0
    %1286 = vmatprep.subr.mxu0 0.0
    %1287 = vmatpush1.xpose.msra.mxu0 0.0
    %1288 = vmatprep.subr.mxu0 0.0
    %1289 = vmatpush1.xpose.msra.mxu0 0.0
    %1290 = vmatprep.subr.mxu0 0.0
    %1291 = vmatpush1.xpose.msra.mxu0 0.0
    %1292 = vmatprep.subr.mxu0 0.0
    %1293 = vmatpush1.xpose.msra.mxu0 0.0
    %1294 = vmatprep.subr.mxu0 0.0
    %1295 = vmatpush1.xpose.msra.mxu0 0.0
    %1296 = vmatprep.subr.mxu0 0.0
    %1297 = vmatpush1.xpose.msra.mxu0 0.0
    %1298 = vmatprep.subr.mxu0 0.0
    %1299 = vmatpush1.xpose.msra.mxu0 0.0
    %1300 = vmatprep.subr.mxu0 0.0
    %1301 = vmatpush1.xpose.msra.mxu0 0.0
    %1302 = vmatprep.subr.mxu0 0.0
    %1303 = vmatpush1.xpose.msra.mxu0 0.0
    %1304 = vmatprep.subr.mxu0 0.0
    %1305 = vmatpush1.xpose.msra.mxu0 0.0
    %1306 = vmatprep.subr.mxu0 0.0
    %1307 = vmatpush1.xpose.msra.mxu0 0.0
    %1308 = vmatprep.subr.mxu0 0.0
    %1309 = vmatpush1.xpose.msra.mxu0 0.0
    %1310 = vmatprep.subr.mxu0 0.0
    %1311 = vmatpush1.xpose.msra.mxu0 0.0
    %1312 = vmatprep.subr.mxu0 0.0
    %1313 = vmatpush1.xpose.msra.mxu0 0.0
    %1314 = vmatprep.mubr.f32.mxu0 0.0
    %1315 = vmatmul.mubr.f32.gmra.mrb[0].mxu0 %v1246
    %v1316 = vpop.f32.mrb[0].mxu0
    %v1317 = vadd.f32 0.0, %v1316
    %v1318 = vpop.f32.mrb[0].mxu0
    %1319 = vdwg.mxu0
    %v1320 = vsel %vm112, -1e+30, %v1317
    %v1321 = vsel %vm116, %v1320, -inf
    %1322 = vmax.xlane.f32.xlu0 %v1321
    %v1323 = vpop.xlane.xlu0 %1322
    %v1324 = vsub.f32 %v1320, %v1323
    %v1325 = vmul.f32 %v1324, 1.442695
    %v1326 = vpow.pop %v1325
    %v1327 = vsel %vm116, %v1326, 0.0
    %1328 = vadd.xlane.f32.xlu0 %v1327
    %v1329 = vpop.xlane.xlu0 %1328
    %v1330 = vrcp.pop %v1329
    %v1331 = vmul.f32 %v1326, %v1330
    %1332 = vrot.lane.b32.xlu0 %v100, 88
    %v1333 = vpop.permute.xlu0 %1332
    %v1336 = vsel %vm116, %v1331, 0
    %1338 = vmatprep.subr.mxu0 0.0
    %1339 = vmatpush1.msra.mxu0 %v1333
    %1340 = vmatprep.subr.mxu0 0.0
    %1341 = vmatpush1.msra.mxu0 0.0
    %1342 = vmatprep.subr.mxu0 0.0
    %1343 = vmatpush1.msra.mxu0 0.0
    %1344 = vmatprep.subr.mxu0 0.0
    %1345 = vmatpush1.msra.mxu0 0.0
    %1346 = vmatprep.subr.mxu0 0.0
    %1347 = vmatpush1.msra.mxu0 0.0
    %1348 = vmatprep.subr.mxu0 0.0
    %1349 = vmatpush1.msra.mxu0 0.0
    %1350 = vmatprep.subr.mxu0 0.0
    %1351 = vmatpush1.msra.mxu0 0.0
    %1352 = vmatprep.subr.mxu0 0.0
    %1353 = vmatpush1.msra.mxu0 0.0
    %1354 = vmatprep.subr.mxu0 0.0
    %1355 = vmatpush1.msra.mxu0 0.0
    %1356 = vmatprep.subr.mxu0 0.0
    %1357 = vmatpush1.msra.mxu0 0.0
    %1358 = vmatprep.subr.mxu0 0.0
    %1359 = vmatpush1.msra.mxu0 0.0
    %1360 = vmatprep.subr.mxu0 0.0
    %1361 = vmatpush1.msra.mxu0 0.0
    %1362 = vmatprep.subr.mxu0 0.0
    %1363 = vmatpush1.msra.mxu0 0.0
    %1364 = vmatprep.subr.mxu0 0.0
    %1365 = vmatpush1.msra.mxu0 0.0
    %1366 = vmatprep.subr.mxu0 0.0
    %1367 = vmatpush1.msra.mxu0 0.0
    %1368 = vmatprep.subr.mxu0 0.0
    %1369 = vmatpush1.msra.mxu0 0.0
    %1370 = vmatprep.subr.mxu0 0.0
    %1371 = vmatpush1.msra.mxu0 0.0
    %1372 = vmatprep.subr.mxu0 0.0
    %1373 = vmatpush1.msra.mxu0 0.0
    %1374 = vmatprep.subr.mxu0 0.0
    %1375 = vmatpush1.msra.mxu0 0.0
    %1376 = vmatprep.subr.mxu0 0.0
    %1377 = vmatpush1.msra.mxu0 0.0
    %1378 = vmatprep.subr.mxu0 0.0
    %1379 = vmatpush1.msra.mxu0 0.0
    %1380 = vmatprep.subr.mxu0 0.0
    %1381 = vmatpush1.msra.mxu0 0.0
    %1382 = vmatprep.subr.mxu0 0.0
    %1383 = vmatpush1.msra.mxu0 0.0
    %1384 = vmatprep.subr.mxu0 0.0
    %1385 = vmatpush1.msra.mxu0 0.0
    %1386 = vmatprep.subr.mxu0 0.0
    %1387 = vmatpush1.msra.mxu0 0.0
    %1388 = vmatprep.subr.mxu0 0.0
    %1389 = vmatpush1.msra.mxu0 0.0
    %1390 = vmatprep.subr.mxu0 0.0
    %1391 = vmatpush1.msra.mxu0 0.0
    %1392 = vmatprep.subr.mxu0 0.0
    %1393 = vmatpush1.msra.mxu0 0.0
    %1394 = vmatprep.subr.mxu0 0.0
    %1395 = vmatpush1.msra.mxu0 0.0
    %1396 = vmatprep.subr.mxu0 0.0
    %1397 = vmatpush1.msra.mxu0 0.0
    %1398 = vmatprep.subr.mxu0 0.0
    %1399 = vmatpush1.msra.mxu0 0.0
    %1400 = vmatprep.subr.mxu0 0.0
    %1401 = vmatpush1.msra.mxu0 0.0
    %1402 = vmatprep.mubr.f32.mxu0 0.0
    %1403 = vmatmul.mubr.f32.gmra.mrb[0].mxu0 %v1336
    %v1404 = vpop.f32.mrb[0].mxu0
    %v1405 = vadd.f32 0.0, %v1404
    %v1406 = vpop.f32.mrb[0].mxu0
    %1407 = vdwg.mxu0
    %v1409 = vsel %vm116, %v1405, 0
    %1411 = vmatprep.subr.mxu0 0.0
    %1412 = vmatpush1.msra.mxu0 %v104
    %1413 = vmatprep.subr.mxu0 0.0
    %1414 = vmatpush1.msra.mxu0 0.0
    %1415 = vmatprep.subr.mxu0 0.0
    %1416 = vmatpush1.msra.mxu0 0.0
    %1417 = vmatprep.subr.mxu0 0.0
    %1418 = vmatpush1.msra.mxu0 0.0
    %1419 = vmatprep.subr.mxu0 0.0
    %1420 = vmatpush1.msra.mxu0 0.0
    %1421 = vmatprep.subr.mxu0 0.0
    %1422 = vmatpush1.msra.mxu0 0.0
    %1423 = vmatprep.subr.mxu0 0.0
    %1424 = vmatpush1.msra.mxu0 0.0
    %1425 = vmatprep.subr.mxu0 0.0
    %1426 = vmatpush1.msra.mxu0 0.0
    %1427 = vmatprep.subr.mxu0 0.0
    %1428 = vmatpush1.msra.mxu0 0.0
    %1429 = vmatprep.subr.mxu0 0.0
    %1430 = vmatpush1.msra.mxu0 0.0
    %1431 = vmatprep.subr.mxu0 0.0
    %1432 = vmatpush1.msra.mxu0 0.0
    %1433 = vmatprep.subr.mxu0 0.0
    %1434 = vmatpush1.msra.mxu0 0.0
    %1435 = vmatprep.subr.mxu0 0.0
    %1436 = vmatpush1.msra.mxu0 0.0
    %1437 = vmatprep.subr.mxu0 0.0
    %1438 = vmatpush1.msra.mxu0 0.0
    %1439 = vmatprep.subr.mxu0 0.0
    %1440 = vmatpush1.msra.mxu0 0.0
    %1441 = vmatprep.subr.mxu0 0.0
    %1442 = vmatpush1.msra.mxu0 0.0
    %1443 = vmatprep.subr.mxu0 0.0
    %1444 = vmatpush1.msra.mxu0 0.0
    %1445 = vmatprep.subr.mxu0 0.0
    %1446 = vmatpush1.msra.mxu0 0.0
    %1447 = vmatprep.subr.mxu0 0.0
    %1448 = vmatpush1.msra.mxu0 0.0
    %1449 = vmatprep.subr.mxu0 0.0
    %1450 = vmatpush1.msra.mxu0 0.0
    %1451 = vmatprep.subr.mxu0 0.0
    %1452 = vmatpush1.msra.mxu0 0.0
    %1453 = vmatprep.subr.mxu0 0.0
    %1454 = vmatpush1.msra.mxu0 0.0
    %1455 = vmatprep.subr.mxu0 0.0
    %1456 = vmatpush1.msra.mxu0 0.0
    %1457 = vmatprep.subr.mxu0 0.0
    %1458 = vmatpush1.msra.mxu0 0.0
    %1459 = vmatprep.subr.mxu0 0.0
    %1460 = vmatpush1.msra.mxu0 0.0
    %1461 = vmatprep.subr.mxu0 0.0
    %1462 = vmatpush1.msra.mxu0 0.0
    %1463 = vmatprep.subr.mxu0 0.0
    %1464 = vmatpush1.msra.mxu0 0.0
    %1465 = vmatprep.subr.mxu0 0.0
    %1466 = vmatpush1.msra.mxu0 0.0
    %1467 = vmatprep.subr.mxu0 0.0
    %1468 = vmatpush1.msra.mxu0 0.0
    %1469 = vmatprep.subr.mxu0 0.0
    %1470 = vmatpush1.msra.mxu0 0.0
    %1471 = vmatprep.subr.mxu0 0.0
    %1472 = vmatpush1.msra.mxu0 0.0
    %1473 = vmatprep.subr.mxu0 0.0
    %1474 = vmatpush1.msra.mxu0 0.0
    %1475 = vmatprep.mubr.f32.mxu0 0.0
    %1476 = vmatmul.mubr.f32.gmra.mrb[0].mxu0 %v1409
    %v1477 = vpop.f32.mrb[0].mxu0
    %v1478 = vadd.f32 0.0, %v1477
    %v1479 = vpop.f32.mrb[0].mxu0
    %1480 = vdwg.mxu0
    %v1482 = vsel %vm116, %v1239, 0
    %1484 = vmatprep.subr.mxu0 0.0
    %1485 = vmatpush1.msra.mxu0 %v103
    %1486 = vmatprep.subr.mxu0 0.0
    %1487 = vmatpush1.msra.mxu0 0.0
    %1488 = vmatprep.subr.mxu0 0.0
    %1489 = vmatpush1.msra.mxu0 0.0
    %1490 = vmatprep.subr.mxu0 0.0
    %1491 = vmatpush1.msra.mxu0 0.0
    %1492 = vmatprep.subr.mxu0 0.0
    %1493 = vmatpush1.msra.mxu0 0.0
    %1494 = vmatprep.subr.mxu0 0.0
    %1495 = vmatpush1.msra.mxu0 0.0
    %1496 = vmatprep.subr.mxu0 0.0
    %1497 = vmatpush1.msra.mxu0 0.0
    %1498 = vmatprep.subr.mxu0 0.0
    %1499 = vmatpush1.msra.mxu0 0.0
    %1500 = vmatprep.subr.mxu0 0.0
    %1501 = vmatpush1.msra.mxu0 0.0
    %1502 = vmatprep.subr.mxu0 0.0
    %1503 = vmatpush1.msra.mxu0 0.0
    %1504 = vmatprep.subr.mxu0 0.0
    %1505 = vmatpush1.msra.mxu0 0.0
    %1506 = vmatprep.subr.mxu0 0.0
    %1507 = vmatpush1.msra.mxu0 0.0
    %1508 = vmatprep.subr.mxu0 0.0
    %1509 = vmatpush1.msra.mxu0 0.0
    %1510 = vmatprep.subr.mxu0 0.0
    %1511 = vmatpush1.msra.mxu0 0.0
    %1512 = vmatprep.subr.mxu0 0.0
    %1513 = vmatpush1.msra.mxu0 0.0
    %1514 = vmatprep.subr.mxu0 0.0
    %1515 = vmatpush1.msra.mxu0 0.0
    %1516 = vmatprep.subr.mxu0 0.0
    %1517 = vmatpush1.msra.mxu0 0.0
    %1518 = vmatprep.subr.mxu0 0.0
    %1519 = vmatpush1.msra.mxu0 0.0
    %1520 = vmatprep.subr.mxu0 0.0
    %1521 = vmatpush1.msra.mxu0 0.0
    %1522 = vmatprep.subr.mxu0 0.0
    %1523 = vmatpush1.msra.mxu0 0.0
    %1524 = vmatprep.subr.mxu0 0.0
    %1525 = vmatpush1.msra.mxu0 0.0
    %1526 = vmatprep.subr.mxu0 0.0
    %1527 = vmatpush1.msra.mxu0 0.0
    %1528 = vmatprep.subr.mxu0 0.0
    %1529 = vmatpush1.msra.mxu0 0.0
    %1530 = vmatprep.subr.mxu0 0.0
    %1531 = vmatpush1.msra.mxu0 0.0
    %1532 = vmatprep.subr.mxu0 0.0
    %1533 = vmatpush1.msra.mxu0 0.0
    %1534 = vmatprep.subr.mxu0 0.0
    %1535 = vmatpush1.msra.mxu0 0.0
    %1536 = vmatprep.subr.mxu0 0.0
    %1537 = vmatpush1.msra.mxu0 0.0
    %1538 = vmatprep.subr.mxu0 0.0
    %1539 = vmatpush1.msra.mxu0 0.0
    %1540 = vmatprep.subr.mxu0 0.0
    %1541 = vmatpush1.msra.mxu0 0.0
    %1542 = vmatprep.subr.mxu0 0.0
    %1543 = vmatpush1.msra.mxu0 0.0
    %1544 = vmatprep.subr.mxu0 0.0
    %1545 = vmatpush1.msra.mxu0 0.0
    %1546 = vmatprep.subr.mxu0 0.0
    %1547 = vmatpush1.msra.mxu0 0.0
    %1548 = vmatprep.mubr.f32.mxu0 0.0
    %1549 = vmatmul.mubr.f32.gmra.mrb[0].mxu0 %v1482
    %v1550 = vpop.f32.mrb[0].mxu0
    %v1551 = vadd.f32 %v1478, %v1550
    %v1552 = vpop.f32.mrb[0].mxu0
    %1553 = vdwg.mxu0
    %1554 = vrot.lane.b32.xlu0 %v100, 80
    %v1555 = vpop.permute.xlu0 %1554
    %1556 = vrot.lane.b32.xlu0 %v100, 72
    %v1557 = vpop.permute.xlu0 %1556
    %v1558 = vsel %vm116, %v1555, 0
    %v1560 = vsel %vm116, %v1557, 0
    %1562 = vmatprep.subr.mxu0 0.0
    %1563 = vmatpush1.xpose.msra.mxu0 %v1560
    %1564 = vmatprep.subr.mxu0 0.0
    %1565 = vmatpush1.xpose.msra.mxu0 0.0
    %1566 = vmatprep.subr.mxu0 0.0
    %1567 = vmatpush1.xpose.msra.mxu0 0.0
    %1568 = vmatprep.subr.mxu0 0.0
    %1569 = vmatpush1.xpose.msra.mxu0 0.0
    %1570 = vmatprep.subr.mxu0 0.0
    %1571 = vmatpush1.xpose.msra.mxu0 0.0
    %1572 = vmatprep.subr.mxu0 0.0
    %1573 = vmatpush1.xpose.msra.mxu0 0.0
    %1574 = vmatprep.subr.mxu0 0.0
    %1575 = vmatpush1.xpose.msra.mxu0 0.0
    %1576 = vmatprep.subr.mxu0 0.0
    %1577 = vmatpush1.xpose.msra.mxu0 0.0
    %1578 = vmatprep.subr.mxu0 0.0
    %1579 = vmatpush1.xpose.msra.mxu0 0.0
    %1580 = vmatprep.subr.mxu0 0.0
    %1581 = vmatpush1.xpose.msra.mxu0 0.0
    %1582 = vmatprep.subr.mxu0 0.0
    %1583 = vmatpush1.xpose.msra.mxu0 0.0
    %1584 = vmatprep.subr.mxu0 0.0
    %1585 = vmatpush1.xpose.msra.mxu0 0.0
    %1586 = vmatprep.subr.mxu0 0.0
    %1587 = vmatpush1.xpose.msra.mxu0 0.0
    %1588 = vmatprep.subr.mxu0 0.0
    %1589 = vmatpush1.xpose.msra.mxu0 0.0
    %1590 = vmatprep.subr.mxu0 0.0
    %1591 = vmatpush1.xpose.msra.mxu0 0.0
    %1592 = vmatprep.subr.mxu0 0.0
    %1593 = vmatpush1.xpose.msra.mxu0 0.0
    %1594 = vmatprep.subr.mxu0 0.0
    %1595 = vmatpush1.xpose.msra.mxu0 0.0
    %1596 = vmatprep.subr.mxu0 0.0
    %1597 = vmatpush1.xpose.msra.mxu0 0.0
    %1598 = vmatprep.subr.mxu0 0.0
    %1599 = vmatpush1.xpose.msra.mxu0 0.0
    %1600 = vmatprep.subr.mxu0 0.0
    %1601 = vmatpush1.xpose.msra.mxu0 0.0
    %1602 = vmatprep.subr.mxu0 0.0
    %1603 = vmatpush1.xpose.msra.mxu0 0.0
    %1604 = vmatprep.subr.mxu0 0.0
    %1605 = vmatpush1.xpose.msra.mxu0 0.0
    %1606 = vmatprep.subr.mxu0 0.0
    %1607 = vmatpush1.xpose.msra.mxu0 0.0
    %1608 = vmatprep.subr.mxu0 0.0
    %1609 = vmatpush1.xpose.msra.mxu0 0.0
    %1610 = vmatprep.subr.mxu0 0.0
    %1611 = vmatpush1.xpose.msra.mxu0 0.0
    %1612 = vmatprep.subr.mxu0 0.0
    %1613 = vmatpush1.xpose.msra.mxu0 0.0
    %1614 = vmatprep.subr.mxu0 0.0
    %1615 = vmatpush1.xpose.msra.mxu0 0.0
    %1616 = vmatprep.subr.mxu0 0.0
    %1617 = vmatpush1.xpose.msra.mxu0 0.0
    %1618 = vmatprep.subr.mxu0 0.0
    %1619 = vmatpush1.xpose.msra.mxu0 0.0
    %1620 = vmatprep.subr.mxu0 0.0
    %1621 = vmatpush1.xpose.msra.mxu0 0.0
    %1622 = vmatprep.subr.mxu0 0.0
    %1623 = vmatpush1.xpose.msra.mxu0 0.0
    %1624 = vmatprep.subr.mxu0 0.0
    %1625 = vmatpush1.xpose.msra.mxu0 0.0
    %1626 = vmatprep.mubr.f32.mxu0 0.0
    %1627 = vmatmul.mubr.f32.gmra.mrb[0].mxu0 %v1558
    %v1628 = vpop.f32.mrb[0].mxu0
    %v1629 = vadd.f32 0.0, %v1628
    %v1630 = vpop.f32.mrb[0].mxu0
    %1631 = vdwg.mxu0
    %v1632 = vsel %vm112, -1e+30, %v1629
    %v1633 = vsel %vm116, %v1632, -inf
    %1634 = vmax.xlane.f32.xlu0 %v1633
    %v1635 = vpop.xlane.xlu0 %1634
    %v1636 = vsub.f32 %v1632, %v1635
    %v1637 = vmul.f32 %v1636, 1.442695
    %v1638 = vpow.pop %v1637
    %v1639 = vsel %vm116, %v1638, 0.0
    %1640 = vadd.xlane.f32.xlu0 %v1639
    %v1641 = vpop.xlane.xlu0 %1640
    %v1642 = vrcp.pop %v1641
    %v1643 = vmul.f32 %v1638, %v1642
    %1644 = vrot.lane.b32.xlu0 %v100, 64
    %v1645 = vpop.permute.xlu0 %1644
    %v1648 = vsel %vm116, %v1643, 0
    %1650 = vmatprep.subr.mxu0 0.0
    %1651 = vmatpush1.msra.mxu0 %v1645
    %1652 = vmatprep.subr.mxu0 0.0
    %1653 = vmatpush1.msra.mxu0 0.0
    %1654 = vmatprep.subr.mxu0 0.0
    %1655 = vmatpush1.msra.mxu0 0.0
    %1656 = vmatprep.subr.mxu0 0.0
    %1657 = vmatpush1.msra.mxu0 0.0
    %1658 = vmatprep.subr.mxu0 0.0
    %1659 = vmatpush1.msra.mxu0 0.0
    %1660 = vmatprep.subr.mxu0 0.0
    %1661 = vmatpush1.msra.mxu0 0.0
    %1662 = vmatprep.subr.mxu0 0.0
    %1663 = vmatpush1.msra.mxu0 0.0
    %1664 = vmatprep.subr.mxu0 0.0
    %1665 = vmatpush1.msra.mxu0 0.0
    %1666 = vmatprep.subr.mxu0 0.0
    %1667 = vmatpush1.msra.mxu0 0.0
    %1668 = vmatprep.subr.mxu0 0.0
    %1669 = vmatpush1.msra.mxu0 0.0
    %1670 = vmatprep.subr.mxu0 0.0
    %1671 = vmatpush1.msra.mxu0 0.0
    %1672 = vmatprep.subr.mxu0 0.0
    %1673 = vmatpush1.msra.mxu0 0.0
    %1674 = vmatprep.subr.mxu0 0.0
    %1675 = vmatpush1.msra.mxu0 0.0
    %1676 = vmatprep.subr.mxu0 0.0
    %1677 = vmatpush1.msra.mxu0 0.0
    %1678 = vmatprep.subr.mxu0 0.0
    %1679 = vmatpush1.msra.mxu0 0.0
    %1680 = vmatprep.subr.mxu0 0.0
    %1681 = vmatpush1.msra.mxu0 0.0
    %1682 = vmatprep.subr.mxu0 0.0
    %1683 = vmatpush1.msra.mxu0 0.0
    %1684 = vmatprep.subr.mxu0 0.0
    %1685 = vmatpush1.msra.mxu0 0.0
    %1686 = vmatprep.subr.mxu0 0.0
    %1687 = vmatpush1.msra.mxu0 0.0
    %1688 = vmatprep.subr.mxu0 0.0
    %1689 = vmatpush1.msra.mxu0 0.0
    %1690 = vmatprep.subr.mxu0 0.0
    %1691 = vmatpush1.msra.mxu0 0.0
    %1692 = vmatprep.subr.mxu0 0.0
    %1693 = vmatpush1.msra.mxu0 0.0
    %1694 = vmatprep.subr.mxu0 0.0
    %1695 = vmatpush1.msra.mxu0 0.0
    %1696 = vmatprep.subr.mxu0 0.0
    %1697 = vmatpush1.msra.mxu0 0.0
    %1698 = vmatprep.subr.mxu0 0.0
    %1699 = vmatpush1.msra.mxu0 0.0
    %1700 = vmatprep.subr.mxu0 0.0
    %1701 = vmatpush1.msra.mxu0 0.0
    %1702 = vmatprep.subr.mxu0 0.0
    %1703 = vmatpush1.msra.mxu0 0.0
    %1704 = vmatprep.subr.mxu0 0.0
    %1705 = vmatpush1.msra.mxu0 0.0
    %1706 = vmatprep.subr.mxu0 0.0
    %1707 = vmatpush1.msra.mxu0 0.0
    %1708 = vmatprep.subr.mxu0 0.0
    %1709 = vmatpush1.msra.mxu0 0.0
    %1710 = vmatprep.subr.mxu0 0.0
    %1711 = vmatpush1.msra.mxu0 0.0
    %1712 = vmatprep.subr.mxu0 0.0
    %1713 = vmatpush1.msra.mxu0 0.0
    %1714 = vmatprep.mubr.f32.mxu0 0.0
    %1715 = vmatmul.mubr.f32.gmra.mrb[0].mxu0 %v1648
    %v1716 = vpop.f32.mrb[0].mxu0
    %v1717 = vadd.f32 0.0, %v1716
    %v1718 = vpop.f32.mrb[0].mxu0
    %1719 = vdwg.mxu0
    %v1721 = vsel %vm116, %v1717, 0
    %1723 = vmatprep.subr.mxu0 0.0
    %1724 = vmatpush1.msra.mxu0 %v105
    %1725 = vmatprep.subr.mxu0 0.0
    %1726 = vmatpush1.msra.mxu0 0.0
    %1727 = vmatprep.subr.mxu0 0.0
    %1728 = vmatpush1.msra.mxu0 0.0
    %1729 = vmatprep.subr.mxu0 0.0
    %1730 = vmatpush1.msra.mxu0 0.0
    %1731 = vmatprep.subr.mxu0 0.0
    %1732 = vmatpush1.msra.mxu0 0.0
    %1733 = vmatprep.subr.mxu0 0.0
    %1734 = vmatpush1.msra.mxu0 0.0
    %1735 = vmatprep.subr.mxu0 0.0
    %1736 = vmatpush1.msra.mxu0 0.0
    %1737 = vmatprep.subr.mxu0 0.0
    %1738 = vmatpush1.msra.mxu0 0.0
    %1739 = vmatprep.subr.mxu0 0.0
    %1740 = vmatpush1.msra.mxu0 0.0
    %1741 = vmatprep.subr.mxu0 0.0
    %1742 = vmatpush1.msra.mxu0 0.0
    %1743 = vmatprep.subr.mxu0 0.0
    %1744 = vmatpush1.msra.mxu0 0.0
    %1745 = vmatprep.subr.mxu0 0.0
    %1746 = vmatpush1.msra.mxu0 0.0
    %1747 = vmatprep.subr.mxu0 0.0
    %1748 = vmatpush1.msra.mxu0 0.0
    %1749 = vmatprep.subr.mxu0 0.0
    %1750 = vmatpush1.msra.mxu0 0.0
    %1751 = vmatprep.subr.mxu0 0.0
    %1752 = vmatpush1.msra.mxu0 0.0
    %1753 = vmatprep.subr.mxu0 0.0
    %1754 = vmatpush1.msra.mxu0 0.0
    %1755 = vmatprep.subr.mxu0 0.0
    %1756 = vmatpush1.msra.mxu0 0.0
    %1757 = vmatprep.subr.mxu0 0.0
    %1758 = vmatpush1.msra.mxu0 0.0
    %1759 = vmatprep.subr.mxu0 0.0
    %1760 = vmatpush1.msra.mxu0 0.0
    %1761 = vmatprep.subr.mxu0 0.0
    %1762 = vmatpush1.msra.mxu0 0.0
    %1763 = vmatprep.subr.mxu0 0.0
    %1764 = vmatpush1.msra.mxu0 0.0
    %1765 = vmatprep.subr.mxu0 0.0
    %1766 = vmatpush1.msra.mxu0 0.0
    %1767 = vmatprep.subr.mxu0 0.0
    %1768 = vmatpush1.msra.mxu0 0.0
    %1769 = vmatprep.subr.mxu0 0.0
    %1770 = vmatpush1.msra.mxu0 0.0
    %1771 = vmatprep.subr.mxu0 0.0
    %1772 = vmatpush1.msra.mxu0 0.0
    %1773 = vmatprep.subr.mxu0 0.0
    %1774 = vmatpush1.msra.mxu0 0.0
    %1775 = vmatprep.subr.mxu0 0.0
    %1776 = vmatpush1.msra.mxu0 0.0
    %1777 = vmatprep.subr.mxu0 0.0
    %1778 = vmatpush1.msra.mxu0 0.0
    %1779 = vmatprep.subr.mxu0 0.0
    %1780 = vmatpush1.msra.mxu0 0.0
    %1781 = vmatprep.subr.mxu0 0.0
    %1782 = vmatpush1.msra.mxu0 0.0
    %1783 = vmatprep.subr.mxu0 0.0
    %1784 = vmatpush1.msra.mxu0 0.0
    %1785 = vmatprep.subr.mxu0 0.0
    %1786 = vmatpush1.msra.mxu0 0.0
    %1787 = vmatprep.mubr.f32.mxu0 0.0
    %1788 = vmatmul.mubr.f32.gmra.mrb[0].mxu0 %v1721
    %v1789 = vpop.f32.mrb[0].mxu0
    %v1790 = vadd.f32 0.0, %v1789
    %v1791 = vpop.f32.mrb[0].mxu0
    %1792 = vdwg.mxu0
    %v1793 = vadd.f32 %v1551, %v1790
    %1794 = vrot.lane.b32.xlu0 %v100, 56
    %v1795 = vpop.permute.xlu0 %1794
    %1796 = vrot.lane.b32.xlu0 %v100, 48
    %v1797 = vpop.permute.xlu0 %1796
    %v1798 = vsel %vm116, %v1795, 0
    %v1800 = vsel %vm116, %v1797, 0
    %1802 = vmatprep.subr.mxu0 0.0
    %1803 = vmatpush1.xpose.msra.mxu0 %v1800
    %1804 = vmatprep.subr.mxu0 0.0
    %1805 = vmatpush1.xpose.msra.mxu0 0.0
    %1806 = vmatprep.subr.mxu0 0.0
    %1807 = vmatpush1.xpose.msra.mxu0 0.0
    %1808 = vmatprep.subr.mxu0 0.0
    %1809 = vmatpush1.xpose.msra.mxu0 0.0
    %1810 = vmatprep.subr.mxu0 0.0
    %1811 = vmatpush1.xpose.msra.mxu0 0.0
    %1812 = vmatprep.subr.mxu0 0.0
    %1813 = vmatpush1.xpose.msra.mxu0 0.0
    %1814 = vmatprep.subr.mxu0 0.0
    %1815 = vmatpush1.xpose.msra.mxu0 0.0
    %1816 = vmatprep.subr.mxu0 0.0
    %1817 = vmatpush1.xpose.msra.mxu0 0.0
    %1818 = vmatprep.subr.mxu0 0.0
    %1819 = vmatpush1.xpose.msra.mxu0 0.0
    %1820 = vmatprep.subr.mxu0 0.0
    %1821 = vmatpush1.xpose.msra.mxu0 0.0
    %1822 = vmatprep.subr.mxu0 0.0
    %1823 = vmatpush1.xpose.msra.mxu0 0.0
    %1824 = vmatprep.subr.mxu0 0.0
    %1825 = vmatpush1.xpose.msra.mxu0 0.0
    %1826 = vmatprep.subr.mxu0 0.0
    %1827 = vmatpush1.xpose.msra.mxu0 0.0
    %1828 = vmatprep.subr.mxu0 0.0
    %1829 = vmatpush1.xpose.msra.mxu0 0.0
    %1830 = vmatprep.subr.mxu0 0.0
    %1831 = vmatpush1.xpose.msra.mxu0 0.0
    %1832 = vmatprep.subr.mxu0 0.0
    %1833 = vmatpush1.xpose.msra.mxu0 0.0
    %1834 = vmatprep.subr.mxu0 0.0
    %1835 = vmatpush1.xpose.msra.mxu0 0.0
    %1836 = vmatprep.subr.mxu0 0.0
    %1837 = vmatpush1.xpose.msra.mxu0 0.0
    %1838 = vmatprep.subr.mxu0 0.0
    %1839 = vmatpush1.xpose.msra.mxu0 0.0
    %1840 = vmatprep.subr.mxu0 0.0
    %1841 = vmatpush1.xpose.msra.mxu0 0.0
    %1842 = vmatprep.subr.mxu0 0.0
    %1843 = vmatpush1.xpose.msra.mxu0 0.0
    %1844 = vmatprep.subr.mxu0 0.0
    %1845 = vmatpush1.xpose.msra.mxu0 0.0
    %1846 = vmatprep.subr.mxu0 0.0
    %1847 = vmatpush1.xpose.msra.mxu0 0.0
    %1848 = vmatprep.subr.mxu0 0.0
    %1849 = vmatpush1.xpose.msra.mxu0 0.0
    %1850 = vmatprep.subr.mxu0 0.0
    %1851 = vmatpush1.xpose.msra.mxu0 0.0
    %1852 = vmatprep.subr.mxu0 0.0
    %1853 = vmatpush1.xpose.msra.mxu0 0.0
    %1854 = vmatprep.subr.mxu0 0.0
    %1855 = vmatpush1.xpose.msra.mxu0 0.0
    %1856 = vmatprep.subr.mxu0 0.0
    %1857 = vmatpush1.xpose.msra.mxu0 0.0
    %1858 = vmatprep.subr.mxu0 0.0
    %1859 = vmatpush1.xpose.msra.mxu0 0.0
    %1860 = vmatprep.subr.mxu0 0.0
    %1861 = vmatpush1.xpose.msra.mxu0 0.0
    %1862 = vmatprep.subr.mxu0 0.0
    %1863 = vmatpush1.xpose.msra.mxu0 0.0
    %1864 = vmatprep.subr.mxu0 0.0
    %1865 = vmatpush1.xpose.msra.mxu0 0.0
    %1866 = vmatprep.mubr.f32.mxu0 0.0
    %1867 = vmatmul.mubr.f32.gmra.mrb[0].mxu0 %v1798
    %v1868 = vpop.f32.mrb[0].mxu0
    %v1869 = vadd.f32 0.0, %v1868
    %v1870 = vpop.f32.mrb[0].mxu0
    %1871 = vdwg.mxu0
    %v1872 = vsel %vm112, -1e+30, %v1869
    %v1873 = vsel %vm116, %v1872, -inf
    %1874 = vmax.xlane.f32.xlu0 %v1873
    %v1875 = vpop.xlane.xlu0 %1874
    %v1876 = vsub.f32 %v1872, %v1875
    %v1877 = vmul.f32 %v1876, 1.442695
    %v1878 = vpow.pop %v1877
    %v1879 = vsel %vm116, %v1878, 0.0
    %1880 = vadd.xlane.f32.xlu0 %v1879
    %v1881 = vpop.xlane.xlu0 %1880
    %v1882 = vrcp.pop %v1881
    %v1883 = vmul.f32 %v1878, %v1882
    %1884 = vrot.lane.b32.xlu0 %v100, 40
    %v1885 = vpop.permute.xlu0 %1884
    %v1888 = vsel %vm116, %v1883, 0
    %1890 = vmatprep.subr.mxu0 0.0
    %1891 = vmatpush1.msra.mxu0 %v1885
    %1892 = vmatprep.subr.mxu0 0.0
    %1893 = vmatpush1.msra.mxu0 0.0
    %1894 = vmatprep.subr.mxu0 0.0
    %1895 = vmatpush1.msra.mxu0 0.0
    %1896 = vmatprep.subr.mxu0 0.0
    %1897 = vmatpush1.msra.mxu0 0.0
    %1898 = vmatprep.subr.mxu0 0.0
    %1899 = vmatpush1.msra.mxu0 0.0
    %1900 = vmatprep.subr.mxu0 0.0
    %1901 = vmatpush1.msra.mxu0 0.0
    %1902 = vmatprep.subr.mxu0 0.0
    %1903 = vmatpush1.msra.mxu0 0.0
    %1904 = vmatprep.subr.mxu0 0.0
    %1905 = vmatpush1.msra.mxu0 0.0
    %1906 = vmatprep.subr.mxu0 0.0
    %1907 = vmatpush1.msra.mxu0 0.0
    %1908 = vmatprep.subr.mxu0 0.0
    %1909 = vmatpush1.msra.mxu0 0.0
    %1910 = vmatprep.subr.mxu0 0.0
    %1911 = vmatpush1.msra.mxu0 0.0
    %1912 = vmatprep.subr.mxu0 0.0
    %1913 = vmatpush1.msra.mxu0 0.0
    %1914 = vmatprep.subr.mxu0 0.0
    %1915 = vmatpush1.msra.mxu0 0.0
    %1916 = vmatprep.subr.mxu0 0.0
    %1917 = vmatpush1.msra.mxu0 0.0
    %1918 = vmatprep.subr.mxu0 0.0
    %1919 = vmatpush1.msra.mxu0 0.0
    %1920 = vmatprep.subr.mxu0 0.0
    %1921 = vmatpush1.msra.mxu0 0.0
    %1922 = vmatprep.subr.mxu0 0.0
    %1923 = vmatpush1.msra.mxu0 0.0
    %1924 = vmatprep.subr.mxu0 0.0
    %1925 = vmatpush1.msra.mxu0 0.0
    %1926 = vmatprep.subr.mxu0 0.0
    %1927 = vmatpush1.msra.mxu0 0.0
    %1928 = vmatprep.subr.mxu0 0.0
    %1929 = vmatpush1.msra.mxu0 0.0
    %1930 = vmatprep.subr.mxu0 0.0
    %1931 = vmatpush1.msra.mxu0 0.0
    %1932 = vmatprep.subr.mxu0 0.0
    %1933 = vmatpush1.msra.mxu0 0.0
    %1934 = vmatprep.subr.mxu0 0.0
    %1935 = vmatpush1.msra.mxu0 0.0
    %1936 = vmatprep.subr.mxu0 0.0
    %1937 = vmatpush1.msra.mxu0 0.0
    %1938 = vmatprep.subr.mxu0 0.0
    %1939 = vmatpush1.msra.mxu0 0.0
    %1940 = vmatprep.subr.mxu0 0.0
    %1941 = vmatpush1.msra.mxu0 0.0
    %1942 = vmatprep.subr.mxu0 0.0
    %1943 = vmatpush1.msra.mxu0 0.0
    %1944 = vmatprep.subr.mxu0 0.0
    %1945 = vmatpush1.msra.mxu0 0.0
    %1946 = vmatprep.subr.mxu0 0.0
    %1947 = vmatpush1.msra.mxu0 0.0
    %1948 = vmatprep.subr.mxu0 0.0
    %1949 = vmatpush1.msra.mxu0 0.0
    %1950 = vmatprep.subr.mxu0 0.0
    %1951 = vmatpush1.msra.mxu0 0.0
    %1952 = vmatprep.subr.mxu0 0.0
    %1953 = vmatpush1.msra.mxu0 0.0
    %1954 = vmatprep.mubr.f32.mxu0 0.0
    %1955 = vmatmul.mubr.f32.gmra.mrb[0].mxu0 %v1888
    %v1956 = vpop.f32.mrb[0].mxu0
    %v1957 = vadd.f32 0.0, %v1956
    %v1958 = vpop.f32.mrb[0].mxu0
    %1959 = vdwg.mxu0
    %v1961 = vsel %vm116, %v1957, 0
    %1963 = vmatprep.subr.mxu0 0.0
    %1964 = vmatpush1.msra.mxu0 %v106
    %1965 = vmatprep.subr.mxu0 0.0
    %1966 = vmatpush1.msra.mxu0 0.0
    %1967 = vmatprep.subr.mxu0 0.0
    %1968 = vmatpush1.msra.mxu0 0.0
    %1969 = vmatprep.subr.mxu0 0.0
    %1970 = vmatpush1.msra.mxu0 0.0
    %1971 = vmatprep.subr.mxu0 0.0
    %1972 = vmatpush1.msra.mxu0 0.0
    %1973 = vmatprep.subr.mxu0 0.0
    %1974 = vmatpush1.msra.mxu0 0.0
    %1975 = vmatprep.subr.mxu0 0.0
    %1976 = vmatpush1.msra.mxu0 0.0
    %1977 = vmatprep.subr.mxu0 0.0
    %1978 = vmatpush1.msra.mxu0 0.0
    %1979 = vmatprep.subr.mxu0 0.0
    %1980 = vmatpush1.msra.mxu0 0.0
    %1981 = vmatprep.subr.mxu0 0.0
    %1982 = vmatpush1.msra.mxu0 0.0
    %1983 = vmatprep.subr.mxu0 0.0
    %1984 = vmatpush1.msra.mxu0 0.0
    %1985 = vmatprep.subr.mxu0 0.0
    %1986 = vmatpush1.msra.mxu0 0.0
    %1987 = vmatprep.subr.mxu0 0.0
    %1988 = vmatpush1.msra.mxu0 0.0
    %1989 = vmatprep.subr.mxu0 0.0
    %1990 = vmatpush1.msra.mxu0 0.0
    %1991 = vmatprep.subr.mxu0 0.0
    %1992 = vmatpush1.msra.mxu0 0.0
    %1993 = vmatprep.subr.mxu0 0.0
    %1994 = vmatpush1.msra.mxu0 0.0
    %1995 = vmatprep.subr.mxu0 0.0
    %1996 = vmatpush1.msra.mxu0 0.0
    %1997 = vmatprep.subr.mxu0 0.0
    %1998 = vmatpush1.msra.mxu0 0.0
    %1999 = vmatprep.subr.mxu0 0.0
    %2000 = vmatpush1.msra.mxu0 0.0
    %2001 = vmatprep.subr.mxu0 0.0
    %2002 = vmatpush1.msra.mxu0 0.0
    %2003 = vmatprep.subr.mxu0 0.0
    %2004 = vmatpush1.msra.mxu0 0.0
    %2005 = vmatprep.subr.mxu0 0.0
    %2006 = vmatpush1.msra.mxu0 0.0
    %2007 = vmatprep.subr.mxu0 0.0
    %2008 = vmatpush1.msra.mxu0 0.0
    %2009 = vmatprep.subr.mxu0 0.0
    %2010 = vmatpush1.msra.mxu0 0.0
    %2011 = vmatprep.subr.mxu0 0.0
    %2012 = vmatpush1.msra.mxu0 0.0
    %2013 = vmatprep.subr.mxu0 0.0
    %2014 = vmatpush1.msra.mxu0 0.0
    %2015 = vmatprep.subr.mxu0 0.0
    %2016 = vmatpush1.msra.mxu0 0.0
    %2017 = vmatprep.subr.mxu0 0.0
    %2018 = vmatpush1.msra.mxu0 0.0
    %2019 = vmatprep.subr.mxu0 0.0
    %2020 = vmatpush1.msra.mxu0 0.0
    %2021 = vmatprep.subr.mxu0 0.0
    %2022 = vmatpush1.msra.mxu0 0.0
    %2023 = vmatprep.subr.mxu0 0.0
    %2024 = vmatpush1.msra.mxu0 0.0
    %2025 = vmatprep.subr.mxu0 0.0
    %2026 = vmatpush1.msra.mxu0 0.0
    %2027 = vmatprep.mubr.f32.mxu0 0.0
    %2028 = vmatmul.mubr.f32.gmra.mrb[0].mxu0 %v1961
    %v2029 = vpop.f32.mrb[0].mxu0
    %v2030 = vadd.f32 0.0, %v2029
    %v2031 = vpop.f32.mrb[0].mxu0
    %2032 = vdwg.mxu0
    %v2033 = vadd.f32 %v1793, %v2030
    %v2034 = vadd.f32 %v2033, %v1074
    %2035 = vst.msk [vmem:[#allocation2 + $0x8] sm:$0xff] %vm21, %v2034
    // Predicated region
    $region14: #{tpu_custom_call.1} parent=1 // pred_check
      _
    $region15: #{tpu_custom_call.1} parent=1 // pred_check_branch
      %2037 = sbr.rel (0) target = $region17
    $region16: #{tpu_custom_call.1} parent=1 // pred_region
      %s2039 = ssub.s32 256, 256
      %2040 = vsyncadd [#allocation3], %s2039
      %s2041 = sshll.u32 [#allocation2], 4
      %s2042 = int_to_ptr.vmem [resolvable:$true] %s2041
      %2047 = dma.vmem_to_hbm [thread:$0]  %s2042, 256, %s3, [#allocation3], 128, 128, 8
    $region17: #{tpu_custom_call.1} parent=1 // pred_fallthru
      _
    // Predicated region
    $region18: #{tpu_custom_call.1} parent=1 // pred_check
      _
    $region19: #{tpu_custom_call.1} parent=1 // pred_check_branch
      %2049 = sbr.rel (0) target = $region21
    $region20: #{tpu_custom_call.1} parent=1 // pred_region
      %2050 = dma.done [#allocation3], 256
    $region21: #{tpu_custom_call.1} parent=1 // pred_fallthru
      _
    %2051 = vsyncpa [#allocation3], 1

</llo_original>
